<compile_context>
chip_gen: v7x
topology: tpu7x:2x2x1
jax: 0.10.0
libtpu: 0.0.40
codegen_flags: <defaults>
</compile_context>

<pallas_src>
import functools

import jax
import jax.numpy as jnp
from jax.experimental import pallas as pl
from jax.experimental.pallas import tpu as pltpu

P = 128  # shared lane width: packed features / weights / outputs all use one 128-lane tile


# --------------------------------------------------------------------------------------
# Fused GATConv layer kernel (projection + masked online-softmax attention + aggregation
# + bias/activation; the final layer also fuses mean-over-heads + log_softmax).
# --------------------------------------------------------------------------------------
def gat_layer_kernel(feat_src_ref, feat_dst_ref, adj_ref, w_ref, wel_ref, bias_ref,
                     out_ref, hpd_sc, m_sc, l_sc, acc_sc, *,
                     num_heads, f_out, negative_slope, final_layer):
    s = pl.program_id(1)
    H = num_heads
    HF = H * f_out            # packed width of the per-head src projection
    ER = HF                   # er (attn_r folded) columns sit right after the projection

    # ---- per-dst-tile init (first src step): dst attention scalars + online-softmax state
    @pl.when(s == 0)
    def _init():
        # dst rows only feed er; attn_r is folded into W_cat, so this is one small matmul.
        hpd_sc[...] = jnp.dot(feat_dst_ref[...], w_ref[...],
                              preferred_element_type=jnp.float32)
        m_sc[...] = jnp.full_like(m_sc, -1e30)
        l_sc[...] = jnp.zeros_like(l_sc)
        acc_sc[...] = jnp.zeros_like(acc_sc)

    # ---- src-side projection for this src tile: all heads (+ er filler) in one matmul
    hp_src = jnp.dot(feat_src_ref[...], w_ref[...],
                     preferred_element_type=jnp.float32)            # (src_tile, P) f32
    # el directly in lane-major form (rows = heads): MXU matmul contracting the feature
    # axis with the composed (W_src_h @ attn_l_h) vectors -> no XLU transposes needed.
    el_t = jax.lax.dot_general(wel_ref[...], feat_src_ref[...],
                               dimension_numbers=(((1,), (1,)), ((), ())),
                               preferred_element_type=jnp.float32)  # (8, src_tile) f32
    # bf16 cast hoisted out of the head loop (MXU operand for the aggregation matmuls).
    h_src = hp_src[:, :HF].astype(jnp.bfloat16)                     # (src_tile, HF)

    # int8 {0,1} adjacency tile -> f32 once; shared by all heads.
    edge_f = adj_ref[...].astype(jnp.float32)                       # (dst_tile, src_tile)

    # ---- per-head masked online softmax + attention-weighted aggregation
    for h in range(H):                                              # static, unrolled
        er = hpd_sc[:, ER + h:ER + h + 1]                           # (dst_tile, 1)
        e = er + el_t[h:h + 1, :]                                   # (dst_tile, src_tile)
        e = jnp.where(e >= 0.0, e, negative_slope * e)              # leaky_relu
        e = jnp.where(edge_f > 0.0, e, -1e30)                       # mask non-edges

        m_prev = m_sc[h]
        m_new = jnp.maximum(m_prev, jnp.max(e, axis=-1, keepdims=True))
        corr = jnp.exp(m_prev - m_new)
        p = jnp.exp(e - m_new) * edge_f                             # masked, unnormalized
        l_sc[h] = corr * l_sc[h] + jnp.sum(p, axis=-1, keepdims=True)
        acc_sc[h] = corr * acc_sc[h] + jnp.dot(
            p.astype(jnp.bfloat16), h_src[:, h * f_out:(h + 1) * f_out],
            preferred_element_type=jnp.float32)                     # (dst_tile, f_out)
        m_sc[h] = m_new

    # ---- finalize on the last src step
    @pl.when(s == pl.num_programs(1) - 1)
    def _finalize():
        bias = bias_ref[...]                                        # (1, P)

        def head_result(h):
            l = l_sc[h]
            valid = (l > 0.0).astype(jnp.float32)                   # zero-in-degree guard
            inv = pl.reciprocal(l + (1.0 - valid), approx=True)     # safe 1/l on the EUP
            return acc_sc[h] * inv + bias[:, h * f_out:(h + 1) * f_out]

        out_ref[...] = jnp.zeros_like(out_ref)                      # keep padded lanes finite
        if final_layer:
            # Mean over heads accumulated directly (no concat + second pass), then
            # log_softmax over the real class lanes.
            head_sum = head_result(0)
            for h in range(1, H):
                head_sum = head_sum + head_result(h)
            mean = head_sum * (1.0 / H)                             # (dst_tile, n_classes)
            mmax = jnp.max(mean, axis=-1, keepdims=True)
            z = mean - mmax
            lse = jnp.log(jnp.sum(jnp.exp(z), axis=-1, keepdims=True))
            out_ref[:, :f_out] = z - lse
        else:
            # ReLU activation; heads stay packed in the shared 128-lane tile so the
            # bf16 result feeds the next layer's projection directly.
            for h in range(H):
                out_ref[:, h * f_out:(h + 1) * f_out] = jnp.maximum(
                    head_result(h), 0.0).astype(out_ref.dtype)


def gat_layer(feat, adj_i8, w_cat, w_el, bias, *, n_dst, num_heads, f_out,
              dst_tile, src_tile, final_layer, out_dtype):
    n_src = feat.shape[0]
    assert n_dst % dst_tile == 0 and n_src % src_tile == 0
    grid = (n_dst // dst_tile, n_src // src_tile)
    kernel = functools.partial(gat_layer_kernel, num_heads=num_heads, f_out=f_out,
                               negative_slope=0.2, final_layer=final_layer)
    return pl.pallas_call(
        kernel,
        out_shape=jax.ShapeDtypeStruct((n_dst, P), out_dtype),
        grid=grid,
        in_specs=[
            pl.BlockSpec((src_tile, P), lambda d, s: (s, 0)),          # feat, src-tile view
            pl.BlockSpec((dst_tile, P), lambda d, s: (d, 0)),          # feat, dst-tile view
            pl.BlockSpec((dst_tile, src_tile), lambda d, s: (d, s)),   # int8 adjacency tile
            pl.BlockSpec((P, P), lambda d, s: (0, 0)),                 # W_cat (proj + er)
            pl.BlockSpec((8, P), lambda d, s: (0, 0)),                 # composed attn_l rows
            pl.BlockSpec((1, P), lambda d, s: (0, 0)),                 # bias
        ],
        out_specs=pl.BlockSpec((dst_tile, P), lambda d, s: (d, 0)),
        scratch_shapes=[
            pltpu.VMEM((dst_tile, P), jnp.float32),                    # dst projection (er)
            pltpu.VMEM((num_heads, dst_tile, 1), jnp.float32),         # online-softmax m
            pltpu.VMEM((num_heads, dst_tile, 1), jnp.float32),         # online-softmax l
            pltpu.VMEM((num_heads, dst_tile, f_out), jnp.float32),     # weighted-sum acc
        ],
        compiler_params=pltpu.CompilerParams(
            dimension_semantics=("parallel", "arbitrary"),
            vmem_limit_bytes=32 * 1024 * 1024),
    )(feat, feat, adj_i8, w_cat, w_el, bias)


def gat_forward(x_bf16, adj0_i8, adj1_i8, packed0, packed1, *, num_heads, n_hidden,
                n_classes, n_dst0, n_dst1):
    n_src0 = x_bf16.shape[0]
    dst_tile0, src_tile0 = min(64, n_dst0), min(128, n_src0)
    dst_tile1, src_tile1 = min(64, n_dst1), min(128, n_dst0)
    h0 = gat_layer(x_bf16, adj0_i8, *packed0, n_dst=n_dst0, num_heads=num_heads,
                   f_out=n_hidden, dst_tile=dst_tile0, src_tile=src_tile0,
                   final_layer=False, out_dtype=jnp.bfloat16)
    out = gat_layer(h0, adj1_i8, *packed1, n_dst=n_dst1, num_heads=num_heads,
                    f_out=n_classes, dst_tile=dst_tile1, src_tile=src_tile1,
                    final_layer=True, out_dtype=jnp.float32)
    return out  # (n_dst1, 128); real classes in [:, :n_classes]


# --------------------------------------------------------------------------------------
# Host-side parameter construction / packing (done once, outside the kernels)
# --------------------------------------------------------------------------------------
def init_gat_params(key, d_in, heads, f_out):
    ks = jax.random.split(key, 4)
    scale = 1.0 / jnp.sqrt(jnp.float32(d_in))
    w_src = jax.random.normal(ks[0], (d_in, heads * f_out), jnp.float32) * scale
    w_dst = jax.random.normal(ks[1], (d_in, heads * f_out), jnp.float32) * scale
    attn_l = jax.random.normal(ks[2], (heads, f_out), jnp.float32) * 0.1
    attn_r = jax.random.normal(ks[3], (heads, f_out), jnp.float32) * 0.1
    bias = jnp.zeros((1, heads * f_out), jnp.float32)   # GATConv bias (zeros init)
    return (w_src, w_dst, attn_l, attn_r, bias)


def pack_layer_params(params, *, d_in, heads, f_out):
    """W_cat (P,P) bf16: cols [0,H*f) = per-head src proj, col H*f+h = W_dst_h@attn_r_h.
    w_el (8,P) bf16: row h = W_src_h@attn_l_h.  bias (1,P) f32: packed like the proj."""
    w_src, w_dst, attn_l, attn_r, bias = params
    HF = heads * f_out
    w_cat = jnp.zeros((P, P), jnp.float32).at[:d_in, :HF].set(w_src)
    w_el = jnp.zeros((8, P), jnp.float32)
    for h in range(heads):
        w_cat = w_cat.at[:d_in, HF + h].set(w_dst[:, h * f_out:(h + 1) * f_out] @ attn_r[h])
        w_el = w_el.at[h, :d_in].set(w_src[:, h * f_out:(h + 1) * f_out] @ attn_l[h])
    bias_p = jnp.zeros((1, P), jnp.float32).at[:, :HF].set(bias)
    return (w_cat.astype(jnp.bfloat16), w_el.astype(jnp.bfloat16), bias_p)


def make_adj(key, n_dst, n_src, p=0.15):
    a = jax.random.bernoulli(key, p, (n_dst, n_src)).astype(jnp.float32)
    # ensure every dst node (prefix of src nodes) has at least its self edge
    return a.at[jnp.arange(n_dst), jnp.arange(n_dst)].set(1.0)


# --------------------------------------------------------------------------------------
# Pure-JAX reference (f32, unpadded) mirroring the PyTorch/DGL forward
# --------------------------------------------------------------------------------------
def gat_layer_ref(feat_src, feat_dst, adj, params, *, heads, f_out, apply_relu):
    w_src, w_dst, attn_l, attn_r, bias = params
    hs_all = feat_src @ w_src
    hd_all = feat_dst @ w_dst
    mask = adj > 0.0
    outs = []
    for h in range(heads):
        lo = h * f_out
        hs = hs_all[:, lo:lo + f_out]
        hd = hd_all[:, lo:lo + f_out]
        el = jnp.sum(hs * attn_l[h], axis=-1, keepdims=True)
        er = jnp.sum(hd * attn_r[h], axis=-1, keepdims=True)
        e = er + el.T
        e = jnp.where(e >= 0.0, e, 0.2 * e)
        e = jnp.where(mask, e, -1e30)
        m = jnp.max(e, axis=-1, keepdims=True)
        pe = jnp.where(mask, jnp.exp(e - m), 0.0)
        denom = jnp.sum(pe, axis=-1, keepdims=True)
        alpha = jnp.where(denom > 0.0, pe / jnp.maximum(denom, 1e-30), 0.0)
        res = alpha @ hs + bias[:, lo:lo + f_out]
        if apply_relu:
            res = jnp.maximum(res, 0.0)
        outs.append(res)
    return jnp.concatenate(outs, axis=-1)


def gat_forward_ref(x, adj0, adj1, params0, params1, *, num_heads, n_hidden, n_classes,
                    n_dst0, n_dst1):
    h = gat_layer_ref(x, x[:n_dst0], adj0, params0,
                      heads=num_heads, f_out=n_hidden, apply_relu=True)
    h = gat_layer_ref(h, h[:n_dst1], adj1, params1,
                      heads=num_heads, f_out=n_classes, apply_relu=False)
    acc = jnp.zeros((h.shape[0], n_classes), jnp.float32)
    for hh in range(num_heads):
        acc = acc + h[:, hh * n_classes:(hh + 1) * n_classes]
    return jax.nn.log_softmax(acc / num_heads, axis=-1)


# --------------------------------------------------------------------------------------
if __name__ == "__main__":
    # GAT(in_feats, n_hidden, n_classes, n_layers=2, num_heads, relu, 0.0)
    in_feats, n_hidden, n_classes, num_heads = 32, 16, 8, 2
    # Synthetic sampled blocks (dst nodes are the prefix of src nodes):
    #   layer0: 256 src -> 128 dst, layer1: 128 src -> 64 dst.
    n_src0, n_dst0 = 256, 128
    n_src1, n_dst1 = 128, 64

    key = jax.random.PRNGKey(0)
    keys = jax.random.split(key, 5)

    x = jax.random.normal(keys[0], (n_src0, in_feats), jnp.float32)
    adj0 = make_adj(keys[1], n_dst0, n_src0)
    adj1 = make_adj(keys[2], n_dst1, n_src1)

    params0 = init_gat_params(keys[3], in_feats, num_heads, n_hidden)
    params1 = init_gat_params(keys[4], n_hidden * num_heads, num_heads, n_classes)

    # Host-side packing: bf16 features padded to one 128-lane tile, int8 adjacency,
    # attention vectors folded into the projection weights.
    x_pad = jnp.zeros((n_src0, P), jnp.float32).at[:, :in_feats].set(x).astype(jnp.bfloat16)
    adj0_i8 = adj0.astype(jnp.int8)
    adj1_i8 = adj1.astype(jnp.int8)
    packed0 = pack_layer_params(params0, d_in=in_feats, heads=num_heads, f_out=n_hidden)
    packed1 = pack_layer_params(params1, d_in=n_hidden * num_heads, heads=num_heads,
                                f_out=n_classes)

    out_pad = gat_forward(x_pad, adj0_i8, adj1_i8, packed0, packed1,
                          num_heads=num_heads, n_hidden=n_hidden, n_classes=n_classes,
                          n_dst0=n_dst0, n_dst1=n_dst1)
    out_pad = jax.block_until_ready(out_pad)
    out = out_pad[:, :n_classes]

    # Check against the pure-JAX f32 reference (kernel uses bf16 MXU inputs and an
    # approximate reciprocal, so compare with a loose tolerance).
    ref = gat_forward_ref(x, adj0, adj1, params0, params1,
                          num_heads=num_heads, n_hidden=n_hidden, n_classes=n_classes,
                          n_dst0=n_dst0, n_dst1=n_dst1)
    assert out.shape == (n_dst1, n_classes)
    assert bool(jnp.all(jnp.isfinite(out)))
    err = float(jnp.max(jnp.abs(out - ref)))
    assert err < 0.1, f"max abs error vs reference: {err}"
    print("KERNEL_OK")
</pallas_src>

<mosaic_0001>
module attributes {stable_mosaic.version = 11 : i64} {
  func.func @gat_layer_kernel(%arg0: i32, %arg1: i32, %arg2: memref<128x128xbf16, #tpu.memory_space<vmem>>, %arg3: memref<64x128xbf16, #tpu.memory_space<vmem>>, %arg4: memref<64x128xi8, #tpu.memory_space<vmem>>, %arg5: memref<128x128xbf16, #tpu.memory_space<vmem>>, %arg6: memref<8x128xbf16, #tpu.memory_space<vmem>>, %arg7: memref<1x128xf32, #tpu.memory_space<vmem>>, %arg8: memref<64x128xbf16, #tpu.memory_space<vmem>>, %arg9: memref<64x128xf32, #tpu.memory_space<vmem>>, %arg10: memref<2x64x1xf32, #tpu.memory_space<vmem>>, %arg11: memref<2x64x1xf32, #tpu.memory_space<vmem>>, %arg12: memref<2x64x16xf32, #tpu.memory_space<vmem>>) attributes {dimension_semantics = [#tpu.dimension_semantics<parallel>, #tpu.dimension_semantics<arbitrary>], iteration_bounds = array<i64: 2, 2>, scalar_prefetch = 0 : i64, scratch_operands = 4 : i64, tpu.core_type = #tpu.core_type<tc>, window_params = [{transform_indices = @transform_0, window_bounds = array<i64: 128, 128>}, {transform_indices = @transform_1, window_bounds = array<i64: 64, 128>}, {transform_indices = @transform_2, window_bounds = array<i64: 64, 128>}, {pipeline_mode = #tpu.pipeline_mode<synchronous>, transform_indices = @transform_3, window_bounds = array<i64: 128, 128>}, {pipeline_mode = #tpu.pipeline_mode<synchronous>, transform_indices = @transform_4, window_bounds = array<i64: 8, 128>}, {pipeline_mode = #tpu.pipeline_mode<synchronous>, transform_indices = @transform_5, window_bounds = array<i64: 1, 128>}, {transform_indices = @transform_6, window_bounds = array<i64: 64, 128>}]} {
    %c0_i32 = arith.constant 0 : i32
    %0 = arith.cmpi eq, %arg1, %c0_i32 : i32
    %1 = arith.extui %0 : i1 to i32
    %c0_i32_0 = arith.constant 0 : i32
    %2 = arith.cmpi ne, %1, %c0_i32_0 : i32
    scf.if %2 {
      %c0_63 = arith.constant 0 : index
      %c0_64 = arith.constant 0 : index
      %112 = vector.load %arg3[%c0_63, %c0_64] : memref<64x128xbf16, #tpu.memory_space<vmem>>, vector<64x128xbf16>
      %c0_65 = arith.constant 0 : index
      %c0_66 = arith.constant 0 : index
      %113 = vector.load %arg5[%c0_65, %c0_66] : memref<128x128xbf16, #tpu.memory_space<vmem>>, vector<128x128xbf16>
      %cst_67 = arith.constant dense<0.000000e+00> : vector<64x128xf32>
      %114 = tpu.matmul %112, %113, %cst_67 {dimension_numbers = #tpu.dot_dimension_numbers<[1], [0], [0], [1], [0, 0, 1, 1], [], []>} : vector<64x128xbf16>, vector<128x128xbf16>, vector<64x128xf32> -> vector<64x128xf32>
      %c0_68 = arith.constant 0 : index
      %c0_69 = arith.constant 0 : index
      %115 = vector.load %arg9[%c0_68, %c0_69] : memref<64x128xf32, #tpu.memory_space<vmem>>, vector<64x128xf32>
      tpu.vector_store %arg9[%c0_68, %c0_69], %114 {strides = array<i32>} : memref<64x128xf32, #tpu.memory_space<vmem>>, vector<64x128xf32>,
      %cst_70 = arith.constant -1.000000e+30 : f32
      %116 = vector.broadcast %cst_70 : f32 to vector<2x64x1xf32>
      %c0_71 = arith.constant 0 : index
      %c0_72 = arith.constant 0 : index
      %c0_73 = arith.constant 0 : index
      %117 = vector.load %arg10[%c0_71, %c0_72, %c0_73] : memref<2x64x1xf32, #tpu.memory_space<vmem>>, vector<2x64x1xf32>
      tpu.vector_store %arg10[%c0_71, %c0_72, %c0_73], %116 {strides = array<i32>} : memref<2x64x1xf32, #tpu.memory_space<vmem>>, vector<2x64x1xf32>,
      %cst_74 = arith.constant 0.000000e+00 : f32
      %118 = vector.broadcast %cst_74 : f32 to vector<2x64x1xf32>
      %c0_75 = arith.constant 0 : index
      %c0_76 = arith.constant 0 : index
      %c0_77 = arith.constant 0 : index
      %119 = vector.load %arg11[%c0_75, %c0_76, %c0_77] : memref<2x64x1xf32, #tpu.memory_space<vmem>>, vector<2x64x1xf32>
      tpu.vector_store %arg11[%c0_75, %c0_76, %c0_77], %118 {strides = array<i32>} : memref<2x64x1xf32, #tpu.memory_space<vmem>>, vector<2x64x1xf32>,
      %cst_78 = arith.constant 0.000000e+00 : f32
      %120 = vector.broadcast %cst_78 : f32 to vector<2x64x16xf32>
      %c0_79 = arith.constant 0 : index
      %c0_80 = arith.constant 0 : index
      %c0_81 = arith.constant 0 : index
      %121 = vector.load %arg12[%c0_79, %c0_80, %c0_81] : memref<2x64x16xf32, #tpu.memory_space<vmem>>, vector<2x64x16xf32>
      tpu.vector_store %arg12[%c0_79, %c0_80, %c0_81], %120 {strides = array<i32>} : memref<2x64x16xf32, #tpu.memory_space<vmem>>, vector<2x64x16xf32>,
    } else {
    }
    %c0 = arith.constant 0 : index
    %c0_1 = arith.constant 0 : index
    %3 = vector.load %arg2[%c0, %c0_1] : memref<128x128xbf16, #tpu.memory_space<vmem>>, vector<128x128xbf16>
    %c0_2 = arith.constant 0 : index
    %c0_3 = arith.constant 0 : index
    %4 = vector.load %arg5[%c0_2, %c0_3] : memref<128x128xbf16, #tpu.memory_space<vmem>>, vector<128x128xbf16>
    %cst = arith.constant dense<0.000000e+00> : vector<128x128xf32>
    %5 = tpu.matmul %3, %4, %cst {dimension_numbers = #tpu.dot_dimension_numbers<[1], [0], [0], [1], [0, 0, 1, 1], [], []>} : vector<128x128xbf16>, vector<128x128xbf16>, vector<128x128xf32> -> vector<128x128xf32>
    %c0_4 = arith.constant 0 : index
    %c0_5 = arith.constant 0 : index
    %6 = vector.load %arg6[%c0_4, %c0_5] : memref<8x128xbf16, #tpu.memory_space<vmem>>, vector<8x128xbf16>
    %c0_6 = arith.constant 0 : index
    %c0_7 = arith.constant 0 : index
    %7 = vector.load %arg2[%c0_6, %c0_7] : memref<128x128xbf16, #tpu.memory_space<vmem>>, vector<128x128xbf16>
    %cst_8 = arith.constant dense<0.000000e+00> : vector<8x128xf32>
    %8 = tpu.matmul %6, %7, %cst_8 {dimension_numbers = #tpu.dot_dimension_numbers<[1], [1], [0], [0], [0, 0, 1, 0], [], []>} : vector<8x128xbf16>, vector<128x128xbf16>, vector<8x128xf32> -> vector<8x128xf32>
    %9 = vector.extract_strided_slice %5 {offsets = [0, 0], sizes = [128, 32], strides = [1, 1]} : vector<128x128xf32> to vector<128x32xf32>
    %10 = arith.truncf %9 : vector<128x32xf32> to vector<128x32xbf16>
    %c0_9 = arith.constant 0 : index
    %c0_10 = arith.constant 0 : index
    %11 = vector.load %arg4[%c0_9, %c0_10] : memref<64x128xi8, #tpu.memory_space<vmem>>, vector<64x128xi8>
    %12 = arith.sitofp %11 : vector<64x128xi8> to vector<64x128xf32>
    %c0_11 = arith.constant 0 : index
    %c32 = arith.constant 32 : index
    %13 = vector.load %arg9[%c0_11, %c32] : memref<64x128xf32, #tpu.memory_space<vmem>>, vector<64x1xf32>
    %14 = vector.extract_strided_slice %8 {offsets = [0, 0], sizes = [1, 128], strides = [1, 1]} : vector<8x128xf32> to vector<1x128xf32>
    %15 = vector.broadcast %13 : vector<64x1xf32> to vector<64x128xf32>
    %16 = vector.broadcast %14 : vector<1x128xf32> to vector<64x128xf32>
    %17 = arith.addf %15, %16 : vector<64x128xf32>
    %cst_12 = arith.constant 0.000000e+00 : f32
    %18 = vector.broadcast %cst_12 : f32 to vector<64x128xf32>
    %19 = arith.cmpf oge, %17, %18 : vector<64x128xf32>
    %cst_13 = arith.constant 2.000000e-01 : f32
    %20 = vector.broadcast %cst_13 : f32 to vector<64x128xf32>
    %21 = arith.mulf %20, %17 : vector<64x128xf32>
    %22 = arith.select %19, %17, %21 : vector<64x128xi1>, vector<64x128xf32>
    %cst_14 = arith.constant 0.000000e+00 : f32
    %23 = vector.broadcast %cst_14 : f32 to vector<64x128xf32>
    %24 = arith.cmpf ogt, %12, %23 : vector<64x128xf32>
    %cst_15 = arith.constant -1.000000e+30 : f32
    %25 = vector.broadcast %cst_15 : f32 to vector<64x128xf32>
    %26 = arith.select %24, %22, %25 : vector<64x128xi1>, vector<64x128xf32>
    %c0_16 = arith.constant 0 : index
    %c0_17 = arith.constant 0 : index
    %c0_18 = arith.constant 0 : index
    %27 = vector.load %arg10[%c0_16, %c0_17, %c0_18] : memref<2x64x1xf32, #tpu.memory_space<vmem>>, vector<1x64x1xf32>
    %28 = vector.shape_cast %27 : vector<1x64x1xf32> to vector<64x1xf32>
    %cst_19 = arith.constant dense<0xFF800000> : vector<64xf32>
    %29 = vector.multi_reduction <maximumf>, %26, %cst_19 [1] : vector<64x128xf32> to vector<64xf32>
    %30 = vector.shape_cast %29 : vector<64xf32> to vector<64x1xf32>
    %31 = arith.maximumf %28, %30 : vector<64x1xf32>
    %32 = arith.subf %28, %31 : vector<64x1xf32>
    %33 = math.exp %32 : vector<64x1xf32>
    %34 = vector.broadcast %31 : vector<64x1xf32> to vector<64x128xf32>
    %35 = arith.subf %26, %34 : vector<64x128xf32>
    %36 = math.exp %35 : vector<64x128xf32>
    %37 = arith.mulf %36, %12 : vector<64x128xf32>
    %c0_20 = arith.constant 0 : index
    %c0_21 = arith.constant 0 : index
    %c0_22 = arith.constant 0 : index
    %38 = vector.load %arg11[%c0_20, %c0_21, %c0_22] : memref<2x64x1xf32, #tpu.memory_space<vmem>>, vector<1x64x1xf32>
    %39 = vector.shape_cast %38 : vector<1x64x1xf32> to vector<64x1xf32>
    %40 = arith.mulf %33, %39 : vector<64x1xf32>
    %cst_23 = arith.constant dense<0.000000e+00> : vector<64xf32>
    %41 = vector.multi_reduction <add>, %37, %cst_23 [1] : vector<64x128xf32> to vector<64xf32>
    %42 = vector.shape_cast %41 : vector<64xf32> to vector<64x1xf32>
    %43 = arith.addf %40, %42 : vector<64x1xf32>
    %c0_24 = arith.constant 0 : index
    %c0_25 = arith.constant 0 : index
    %c0_26 = arith.constant 0 : index
    %44 = vector.load %arg11[%c0_24, %c0_25, %c0_26] : memref<2x64x1xf32, #tpu.memory_space<vmem>>, vector<1x64x1xf32>
    %45 = vector.shape_cast %44 : vector<1x64x1xf32> to vector<64x1xf32>
    %46 = vector.shape_cast %43 : vector<64x1xf32> to vector<1x64x1xf32>
    tpu.vector_store %arg11[%c0_24, %c0_25, %c0_26], %46 {strides = array<i32>} : memref<2x64x1xf32, #tpu.memory_space<vmem>>, vector<1x64x1xf32>,
    %c0_27 = arith.constant 0 : index
    %c0_28 = arith.constant 0 : index
    %c0_29 = arith.constant 0 : index
    %47 = vector.load %arg12[%c0_27, %c0_28, %c0_29] : memref<2x64x16xf32, #tpu.memory_space<vmem>>, vector<1x64x16xf32>
    %48 = vector.shape_cast %47 : vector<1x64x16xf32> to vector<64x16xf32>
    %49 = vector.broadcast %33 : vector<64x1xf32> to vector<64x16xf32>
    %50 = arith.mulf %49, %48 : vector<64x16xf32>
    %51 = arith.truncf %37 : vector<64x128xf32> to vector<64x128xbf16>
    %52 = vector.extract_strided_slice %10 {offsets = [0, 0], sizes = [128, 16], strides = [1, 1]} : vector<128x32xbf16> to vector<128x16xbf16>
    %cst_30 = arith.constant dense<0.000000e+00> : vector<64x16xf32>
    %53 = tpu.matmul %51, %52, %cst_30 {dimension_numbers = #tpu.dot_dimension_numbers<[1], [0], [0], [1], [0, 0, 1, 1], [], []>} : vector<64x128xbf16>, vector<128x16xbf16>, vector<64x16xf32> -> vector<64x16xf32>
    %54 = arith.addf %50, %53 : vector<64x16xf32>
    %c0_31 = arith.constant 0 : index
    %c0_32 = arith.constant 0 : index
    %c0_33 = arith.constant 0 : index
    %55 = vector.load %arg12[%c0_31, %c0_32, %c0_33] : memref<2x64x16xf32, #tpu.memory_space<vmem>>, vector<1x64x16xf32>
    %56 = vector.shape_cast %55 : vector<1x64x16xf32> to vector<64x16xf32>
    %57 = vector.shape_cast %54 : vector<64x16xf32> to vector<1x64x16xf32>
    tpu.vector_store %arg12[%c0_31, %c0_32, %c0_33], %57 {strides = array<i32>} : memref<2x64x16xf32, #tpu.memory_space<vmem>>, vector<1x64x16xf32>,
    %c0_34 = arith.constant 0 : index
    %c0_35 = arith.constant 0 : index
    %c0_36 = arith.constant 0 : index
    %58 = vector.load %arg10[%c0_34, %c0_35, %c0_36] : memref<2x64x1xf32, #tpu.memory_space<vmem>>, vector<1x64x1xf32>
    %59 = vector.shape_cast %58 : vector<1x64x1xf32> to vector<64x1xf32>
    %60 = vector.shape_cast %31 : vector<64x1xf32> to vector<1x64x1xf32>
    tpu.vector_store %arg10[%c0_34, %c0_35, %c0_36], %60 {strides = array<i32>} : memref<2x64x1xf32, #tpu.memory_space<vmem>>, vector<1x64x1xf32>,
    %c0_37 = arith.constant 0 : index
    %c33 = arith.constant 33 : index
    %61 = vector.load %arg9[%c0_37, %c33] : memref<64x128xf32, #tpu.memory_space<vmem>>, vector<64x1xf32>
    %62 = vector.extract_strided_slice %8 {offsets = [1, 0], sizes = [1, 128], strides = [1, 1]} : vector<8x128xf32> to vector<1x128xf32>
    %63 = vector.broadcast %61 : vector<64x1xf32> to vector<64x128xf32>
    %64 = vector.broadcast %62 : vector<1x128xf32> to vector<64x128xf32>
    %65 = arith.addf %63, %64 : vector<64x128xf32>
    %cst_38 = arith.constant 0.000000e+00 : f32
    %66 = vector.broadcast %cst_38 : f32 to vector<64x128xf32>
    %67 = arith.cmpf oge, %65, %66 : vector<64x128xf32>
    %cst_39 = arith.constant 2.000000e-01 : f32
    %68 = vector.broadcast %cst_39 : f32 to vector<64x128xf32>
    %69 = arith.mulf %68, %65 : vector<64x128xf32>
    %70 = arith.select %67, %65, %69 : vector<64x128xi1>, vector<64x128xf32>
    %cst_40 = arith.constant 0.000000e+00 : f32
    %71 = vector.broadcast %cst_40 : f32 to vector<64x128xf32>
    %72 = arith.cmpf ogt, %12, %71 : vector<64x128xf32>
    %cst_41 = arith.constant -1.000000e+30 : f32
    %73 = vector.broadcast %cst_41 : f32 to vector<64x128xf32>
    %74 = arith.select %72, %70, %73 : vector<64x128xi1>, vector<64x128xf32>
    %c1 = arith.constant 1 : index
    %c0_42 = arith.constant 0 : index
    %c0_43 = arith.constant 0 : index
    %75 = vector.load %arg10[%c1, %c0_42, %c0_43] : memref<2x64x1xf32, #tpu.memory_space<vmem>>, vector<1x64x1xf32>
    %76 = vector.shape_cast %75 : vector<1x64x1xf32> to vector<64x1xf32>
    %cst_44 = arith.constant dense<0xFF800000> : vector<64xf32>
    %77 = vector.multi_reduction <maximumf>, %74, %cst_44 [1] : vector<64x128xf32> to vector<64xf32>
    %78 = vector.shape_cast %77 : vector<64xf32> to vector<64x1xf32>
    %79 = arith.maximumf %76, %78 : vector<64x1xf32>
    %80 = arith.subf %76, %79 : vector<64x1xf32>
    %81 = math.exp %80 : vector<64x1xf32>
    %82 = vector.broadcast %79 : vector<64x1xf32> to vector<64x128xf32>
    %83 = arith.subf %74, %82 : vector<64x128xf32>
    %84 = math.exp %83 : vector<64x128xf32>
    %85 = arith.mulf %84, %12 : vector<64x128xf32>
    %c1_45 = arith.constant 1 : index
    %c0_46 = arith.constant 0 : index
    %c0_47 = arith.constant 0 : index
    %86 = vector.load %arg11[%c1_45, %c0_46, %c0_47] : memref<2x64x1xf32, #tpu.memory_space<vmem>>, vector<1x64x1xf32>
    %87 = vector.shape_cast %86 : vector<1x64x1xf32> to vector<64x1xf32>
    %88 = arith.mulf %81, %87 : vector<64x1xf32>
    %cst_48 = arith.constant dense<0.000000e+00> : vector<64xf32>
    %89 = vector.multi_reduction <add>, %85, %cst_48 [1] : vector<64x128xf32> to vector<64xf32>
    %90 = vector.shape_cast %89 : vector<64xf32> to vector<64x1xf32>
    %91 = arith.addf %88, %90 : vector<64x1xf32>
    %c1_49 = arith.constant 1 : index
    %c0_50 = arith.constant 0 : index
    %c0_51 = arith.constant 0 : index
    %92 = vector.load %arg11[%c1_49, %c0_50, %c0_51] : memref<2x64x1xf32, #tpu.memory_space<vmem>>, vector<1x64x1xf32>
    %93 = vector.shape_cast %92 : vector<1x64x1xf32> to vector<64x1xf32>
    %94 = vector.shape_cast %91 : vector<64x1xf32> to vector<1x64x1xf32>
    tpu.vector_store %arg11[%c1_49, %c0_50, %c0_51], %94 {strides = array<i32>} : memref<2x64x1xf32, #tpu.memory_space<vmem>>, vector<1x64x1xf32>,
    %c1_52 = arith.constant 1 : index
    %c0_53 = arith.constant 0 : index
    %c0_54 = arith.constant 0 : index
    %95 = vector.load %arg12[%c1_52, %c0_53, %c0_54] : memref<2x64x16xf32, #tpu.memory_space<vmem>>, vector<1x64x16xf32>
    %96 = vector.shape_cast %95 : vector<1x64x16xf32> to vector<64x16xf32>
    %97 = vector.broadcast %81 : vector<64x1xf32> to vector<64x16xf32>
    %98 = arith.mulf %97, %96 : vector<64x16xf32>
    %99 = arith.truncf %85 : vector<64x128xf32> to vector<64x128xbf16>
    %100 = vector.extract_strided_slice %10 {offsets = [0, 16], sizes = [128, 16], strides = [1, 1]} : vector<128x32xbf16> to vector<128x16xbf16>
    %cst_55 = arith.constant dense<0.000000e+00> : vector<64x16xf32>
    %101 = tpu.matmul %99, %100, %cst_55 {dimension_numbers = #tpu.dot_dimension_numbers<[1], [0], [0], [1], [0, 0, 1, 1], [], []>} : vector<64x128xbf16>, vector<128x16xbf16>, vector<64x16xf32> -> vector<64x16xf32>
    %102 = arith.addf %98, %101 : vector<64x16xf32>
    %c1_56 = arith.constant 1 : index
    %c0_57 = arith.constant 0 : index
    %c0_58 = arith.constant 0 : index
    %103 = vector.load %arg12[%c1_56, %c0_57, %c0_58] : memref<2x64x16xf32, #tpu.memory_space<vmem>>, vector<1x64x16xf32>
    %104 = vector.shape_cast %103 : vector<1x64x16xf32> to vector<64x16xf32>
    %105 = vector.shape_cast %102 : vector<64x16xf32> to vector<1x64x16xf32>
    tpu.vector_store %arg12[%c1_56, %c0_57, %c0_58], %105 {strides = array<i32>} : memref<2x64x16xf32, #tpu.memory_space<vmem>>, vector<1x64x16xf32>,
    %c1_59 = arith.constant 1 : index
    %c0_60 = arith.constant 0 : index
    %c0_61 = arith.constant 0 : index
    %106 = vector.load %arg10[%c1_59, %c0_60, %c0_61] : memref<2x64x1xf32, #tpu.memory_space<vmem>>, vector<1x64x1xf32>
    %107 = vector.shape_cast %106 : vector<1x64x1xf32> to vector<64x1xf32>
    %108 = vector.shape_cast %79 : vector<64x1xf32> to vector<1x64x1xf32>
    tpu.vector_store %arg10[%c1_59, %c0_60, %c0_61], %108 {strides = array<i32>} : memref<2x64x1xf32, #tpu.memory_space<vmem>>, vector<1x64x1xf32>,
    %c1_i32 = arith.constant 1 : i32
    %109 = arith.cmpi eq, %arg1, %c1_i32 : i32
    %110 = arith.extui %109 : i1 to i32
    %c0_i32_62 = arith.constant 0 : i32
    %111 = arith.cmpi ne, %110, %c0_i32_62 : i32
    scf.if %111 {
      %c0_63 = arith.constant 0 : index
      %c0_64 = arith.constant 0 : index
      %112 = vector.load %arg7[%c0_63, %c0_64] : memref<1x128xf32, #tpu.memory_space<vmem>>, vector<1x128xf32>
      %cst_65 = arith.constant 0.000000e+00 : bf16
      %113 = vector.broadcast %cst_65 : bf16 to vector<64x128xbf16>
      %c0_66 = arith.constant 0 : index
      %c0_67 = arith.constant 0 : index
      %114 = vector.load %arg8[%c0_66, %c0_67] : memref<64x128xbf16, #tpu.memory_space<vmem>>, vector<64x128xbf16>
      tpu.vector_store %arg8[%c0_66, %c0_67], %113 {strides = array<i32>} : memref<64x128xbf16, #tpu.memory_space<vmem>>, vector<64x128xbf16>,
      %c0_68 = arith.constant 0 : index
      %c0_69 = arith.constant 0 : index
      %c0_70 = arith.constant 0 : index
      %115 = vector.load %arg11[%c0_68, %c0_69, %c0_70] : memref<2x64x1xf32, #tpu.memory_space<vmem>>, vector<1x64x1xf32>
      %116 = vector.shape_cast %115 : vector<1x64x1xf32> to vector<64x1xf32>
      %cst_71 = arith.constant 0.000000e+00 : f32
      %117 = vector.broadcast %cst_71 : f32 to vector<64x1xf32>
      %118 = arith.cmpf ogt, %116, %117 : vector<64x1xf32>
      %119 = arith.extui %118 : vector<64x1xi1> to vector<64x1xi32>
      %120 = arith.sitofp %119 : vector<64x1xi32> to vector<64x1xf32>
      %cst_72 = arith.constant 1.000000e+00 : f32
      %121 = vector.broadcast %cst_72 : f32 to vector<64x1xf32>
      %122 = arith.subf %121, %120 : vector<64x1xf32>
      %123 = arith.addf %116, %122 : vector<64x1xf32>
      %124 = tpu.reciprocal %123 {approx = true} : vector<64x1xf32> -> vector<64x1xf32>
      %c0_73 = arith.constant 0 : index
      %c0_74 = arith.constant 0 : index
      %c0_75 = arith.constant 0 : index
      %125 = vector.load %arg12[%c0_73, %c0_74, %c0_75] : memref<2x64x16xf32, #tpu.memory_space<vmem>>, vector<1x64x16xf32>
      %126 = vector.shape_cast %125 : vector<1x64x16xf32> to vector<64x16xf32>
      %127 = vector.broadcast %124 : vector<64x1xf32> to vector<64x16xf32>
      %128 = arith.mulf %126, %127 : vector<64x16xf32>
      %129 = vector.extract_strided_slice %112 {offsets = [0, 0], sizes = [1, 16], strides = [1, 1]} : vector<1x128xf32> to vector<1x16xf32>
      %130 = vector.broadcast %129 : vector<1x16xf32> to vector<64x16xf32>
      %131 = arith.addf %128, %130 : vector<64x16xf32>
      %cst_76 = arith.constant 0.000000e+00 : f32
      %132 = vector.broadcast %cst_76 : f32 to vector<64x16xf32>
      %133 = arith.maximumf %131, %132 : vector<64x16xf32>
      %134 = arith.truncf %133 : vector<64x16xf32> to vector<64x16xbf16>
      %c0_77 = arith.constant 0 : index
      %c0_78 = arith.constant 0 : index
      %135 = vector.load %arg8[%c0_77, %c0_78] : memref<64x128xbf16, #tpu.memory_space<vmem>>, vector<64x16xbf16>
      tpu.vector_store %arg8[%c0_77, %c0_78], %134 {strides = array<i32>} : memref<64x128xbf16, #tpu.memory_space<vmem>>, vector<64x16xbf16>,
      %c1_79 = arith.constant 1 : index
      %c0_80 = arith.constant 0 : index
      %c0_81 = arith.constant 0 : index
      %136 = vector.load %arg11[%c1_79, %c0_80, %c0_81] : memref<2x64x1xf32, #tpu.memory_space<vmem>>, vector<1x64x1xf32>
      %137 = vector.shape_cast %136 : vector<1x64x1xf32> to vector<64x1xf32>
      %cst_82 = arith.constant 0.000000e+00 : f32
      %138 = vector.broadcast %cst_82 : f32 to vector<64x1xf32>
      %139 = arith.cmpf ogt, %137, %138 : vector<64x1xf32>
      %140 = arith.extui %139 : vector<64x1xi1> to vector<64x1xi32>
      %141 = arith.sitofp %140 : vector<64x1xi32> to vector<64x1xf32>
      %cst_83 = arith.constant 1.000000e+00 : f32
      %142 = vector.broadcast %cst_83 : f32 to vector<64x1xf32>
      %143 = arith.subf %142, %141 : vector<64x1xf32>
      %144 = arith.addf %137, %143 : vector<64x1xf32>
      %145 = tpu.reciprocal %144 {approx = true} : vector<64x1xf32> -> vector<64x1xf32>
      %c1_84 = arith.constant 1 : index
      %c0_85 = arith.constant 0 : index
      %c0_86 = arith.constant 0 : index
      %146 = vector.load %arg12[%c1_84, %c0_85, %c0_86] : memref<2x64x16xf32, #tpu.memory_space<vmem>>, vector<1x64x16xf32>
      %147 = vector.shape_cast %146 : vector<1x64x16xf32> to vector<64x16xf32>
      %148 = vector.broadcast %145 : vector<64x1xf32> to vector<64x16xf32>
      %149 = arith.mulf %147, %148 : vector<64x16xf32>
      %150 = vector.extract_strided_slice %112 {offsets = [0, 16], sizes = [1, 16], strides = [1, 1]} : vector<1x128xf32> to vector<1x16xf32>
      %151 = vector.broadcast %150 : vector<1x16xf32> to vector<64x16xf32>
      %152 = arith.addf %149, %151 : vector<64x16xf32>
      %cst_87 = arith.constant 0.000000e+00 : f32
      %153 = vector.broadcast %cst_87 : f32 to vector<64x16xf32>
      %154 = arith.maximumf %152, %153 : vector<64x16xf32>
      %155 = arith.truncf %154 : vector<64x16xf32> to vector<64x16xbf16>
      %c0_88 = arith.constant 0 : index
      %c16 = arith.constant 16 : index
      %156 = vector.load %arg8[%c0_88, %c16] : memref<64x128xbf16, #tpu.memory_space<vmem>>, vector<64x16xbf16>
      tpu.vector_store %arg8[%c0_88, %c16], %155 {strides = array<i32>} : memref<64x128xbf16, #tpu.memory_space<vmem>>, vector<64x16xbf16>,
    } else {
    }
    return
  }
  func.func @transform_0(%arg0: i32, %arg1: i32) -> (i32, i32) {
    %c0_i32 = arith.constant 0 : i32
    %c0_i32_0 = arith.constant 0 : i32
    return %arg1, %c0_i32 : i32, i32
  }
  func.func @transform_1(%arg0: i32, %arg1: i32) -> (i32, i32) {
    %c0_i32 = arith.constant 0 : i32
    %c0_i32_0 = arith.constant 0 : i32
    return %arg0, %c0_i32 : i32, i32
  }
  func.func @transform_2(%arg0: i32, %arg1: i32) -> (i32, i32) {
    %c0_i32 = arith.constant 0 : i32
    return %arg0, %arg1 : i32, i32
  }
  func.func @transform_3(%arg0: i32, %arg1: i32) -> (i32, i32) {
    %c0_i32 = arith.constant 0 : i32
    %c0_i32_0 = arith.constant 0 : i32
    %c0_i32_1 = arith.constant 0 : i32
    return %c0_i32, %c0_i32_0 : i32, i32
  }
  func.func @transform_4(%arg0: i32, %arg1: i32) -> (i32, i32) {
    %c0_i32 = arith.constant 0 : i32
    %c0_i32_0 = arith.constant 0 : i32
    %c0_i32_1 = arith.constant 0 : i32
    return %c0_i32, %c0_i32_0 : i32, i32
  }
  func.func @transform_5(%arg0: i32, %arg1: i32) -> (i32, i32) {
    %c0_i32 = arith.constant 0 : i32
    %c0_i32_0 = arith.constant 0 : i32
    %c0_i32_1 = arith.constant 0 : i32
    return %c0_i32, %c0_i32_0 : i32, i32
  }
  func.func @transform_6(%arg0: i32, %arg1: i32) -> (i32, i32) {
    %c0_i32 = arith.constant 0 : i32
    %c0_i32_0 = arith.constant 0 : i32
    return %arg0, %c0_i32 : i32, i32
  }
}

</mosaic_0001>

<llo_original>
// kernel: tpu_custom_call.1
$region0: #{tpu_custom_call.1}
  #allocation0 [shape = 'u32[]', space=smem, size = 0x4, offset = 0x4, fixed_abs, tag = 'smem constant byte address 0x4 - core index']
  #allocation1 [shape = 'u32[144,128]{1,0:T(1,128)}', space=vmem, size = 0x12000, scoped, tag = 'internal scratch']
  #allocation2 [shape = 'f32[64,128]{1,0:T(8,128)}', space=vmem, size = 0x8000, scoped, tag = 'scratch operand']
  #allocation3 [shape = 'f32[2,64,1]{2,1,0:T(8,128)}', space=vmem, size = 0x10000, scoped, tag = 'scratch operand']
  #allocation4 [shape = 'f32[2,64,1]{2,1,0:T(8,128)}', space=vmem, size = 0x10000, scoped, tag = 'scratch operand']
  #allocation5 [shape = 'f32[2,64,16]{2,1,0:T(8,128)}', space=vmem, size = 0x10000, scoped, tag = 'scratch operand']
  %s0 = inlined_call_operand.hbm [shape: bf16[256,128], index: 0, kind: input, shape index: {}]
  %s1 = inlined_call_operand.hbm [shape: bf16[256,128], index: 1, kind: input, shape index: {}]
  %s2 = inlined_call_operand.hbm [shape: s8[128,256], index: 2, kind: input, shape index: {}]
  %s3 = inlined_call_operand.hbm [shape: bf16[128,128], index: 3, kind: input, shape index: {}]
  %s4 = inlined_call_operand.vmem [shape: bf16[8,128], index: 4, kind: input, shape index: {}]
  %s5 = inlined_call_operand.vmem [shape: f32[1,128], index: 5, kind: input, shape index: {}]
  %s6 = inlined_call_operand.hbm [shape: bf16[128,128], index: 6, kind: output, shape index: {}]
  %s7 = sld [smem:[#allocation0]]
  $region81: #{tpu_custom_call.1} parent=0
    _
  %s9 = ssub.s32 1, %s7
  %s10 = scalar_select 0, %s9, %s7
  $region1: #{tpu_custom_call.1} parent=0
    #allocation6 [shape = 'u8[65536]{0}', space=vmem, size = 0x10000, scoped, tag = 'input window, operand 0']
    #allocation7 [shape = 's32[2]{0}', space=sflag, size = 0x8, scoped, tag = 'scoped memory for tpu_custom_call.1']
    #allocation8 [shape = 's32[2]{0}', space=sflag, size = 0x8, scoped, tag = 'scoped memory for tpu_custom_call.1']
    #allocation9 [shape = 'u8[32768]{0}', space=vmem, size = 0x8000, scoped, tag = 'input window, operand 1']
    #allocation10 [shape = 's32[2]{0}', space=sflag, size = 0x8, scoped, tag = 'scoped memory for tpu_custom_call.1']
    #allocation11 [shape = 'u8[16384]{0}', space=vmem, size = 0x4000, scoped, tag = 'input window, operand 2']
    #allocation12 [shape = 'u8[32768]{0}', space=vmem, size = 0x8000, scoped, tag = 'input window, operand 3, single buffered']
    #allocation13 [shape = 's32[1]{0}', space=sflag, size = 0x4, scoped, tag = 'scoped memory for tpu_custom_call.1']
    #allocation14 [shape = 'u8[32768]{0}', space=vmem, size = 0x8000, scoped, tag = 'output window, operand 0']
    %11 = vsyncpa [#allocation7], 0
    %s12 = scalar_lea.sflag [#allocation7], 1
    %13 = vsyncpa %s12, 0
    %14 = vsyncpa [#allocation10], 0
    %s15 = scalar_lea.sflag [#allocation10], 1
    %16 = vsyncpa %s15, 0
    %17 = vsyncpa [#allocation13], 0
    %18 = vsyncpa [#allocation8], 0
    %s19 = scalar_lea.sflag [#allocation8], 1
    %20 = vsyncpa %s19, 0
    loop: start=0, step=1, limit=6
    $region2: #{tpu_custom_call.1} parent=1 // loop_pre_header
      _
    $region3: #{tpu_custom_call.1} parent=1 // loop_header
      %s22 = sphi 0, %s26
      %p23 = scmp.ge.s32.totalorder %s22, 6
      %s29 = sphi 0, %s41
      %s30 = sphi 0, %s37
      %s31 = sphi 0, %s29
      %s32 = sphi 0, %s30
      %s33 = sphi 0, %s31
      %s34 = sphi 0, %s32
      %s44 = sphi 0, %s46
      %s47 = sphi 0, %s44
      %s48 = sphi 0, %s47
      %s64 = sphi 0, %s48
      %s70 = sphi 0, %s72
      %s73 = sphi 0, %s70
      %s74 = sphi 0, %s73
      %s90 = sphi 0, %s74
      %s98 = sphi 0, %s100
      %s101 = sphi 0, %s98
      %s102 = sphi 0, %s101
      %s118 = sphi 0, %s102
      %s122 = sphi 0, %s122
      %s124 = sphi 0, %s122
      %s125 = sphi 0, %s124
      %s139 = sphi 0, %s125
      %s143 = sphi 0, %s143
      %s145 = sphi 0, %s143
      %s146 = sphi 0, %s145
      %s160 = sphi 0, %s146
      %s164 = sphi 0, %s164
      %s166 = sphi 0, %s164
      %s167 = sphi 0, %s166
      %s181 = sphi 0, %s167
      %s187 = sphi 0, %s189
      %s190 = sphi 0, %s187
      %s191 = sphi 0, %s190
      %s207 = sphi 0, %s191
    $region4: #{tpu_custom_call.1} parent=1 // loop_header_branch
      %25 = sbr.rel (%p23) target = $region8
    $region5: #{tpu_custom_call.1} parent=1 // loop_body
      %s27 = ssub.s32 %s22, 1
      %s28 = ssub.s32 %s22, 2
      %s35 = sadd.s32 1, %s30
      %p36 = scmp.ge.s32.totalorder %s35, 2
      %s37 = scalar_select %p36, 0, %s35
      %s38 = sadd.s32 1, %s29
      %s39 = scalar_select %p36, %s38, %s29
      %p40 = scmp.ge.s32.totalorder %s39, 2
      %s41 = scalar_select %p40, 0, %s39
      %s42 = ssub.s32 %s30, %s37
      %p43 = scmp.eq.s32.totalorder %s42, 0
      %s45 = sadd.s32 %s44, 1
      %s46 = scalar_select %p43, %s44, %s45
      %p49 = pneg %p43
      %p50 = scmp.eq.s32.totalorder %s22, 3
      %p51 = por %p49, %p50
      %p52 = scmp.ne.s32.totalorder %s44, %s47
      %p53 = scmp.eq.s32.totalorder %s22, 0
      %p54 = por %p52, %p53
      %p55 = scmp.ne.s32.totalorder %s44, %s47
      %p56 = scmp.eq.s32.totalorder %s27, 3
      %p57 = por %p55, %p56
      %p58 = scmp.ne.s32.totalorder %s47, %s48
      %p59 = scmp.eq.s32.totalorder %s27, 0
      %p60 = por %p58, %p59
      %p61 = scmp.ne.s32.totalorder %s47, %s48
      %p62 = scmp.eq.s32.totalorder %s28, 3
      %p63 = por %p61, %p62
      %p65 = scmp.ne.s32.totalorder %s48, %s64
      %p66 = scmp.eq.s32.totalorder %s28, 0
      %p67 = por %p65, %p66
      %s68 = ssub.s32 %s29, %s41
      %p69 = scmp.eq.s32.totalorder %s68, 0
      %s71 = sadd.s32 %s70, 1
      %s72 = scalar_select %p69, %s70, %s71
      %p75 = pneg %p69
      %p76 = scmp.eq.s32.totalorder %s22, 3
      %p77 = por %p75, %p76
      %p78 = scmp.ne.s32.totalorder %s70, %s73
      %p79 = scmp.eq.s32.totalorder %s22, 0
      %p80 = por %p78, %p79
      %p81 = scmp.ne.s32.totalorder %s70, %s73
      %p82 = scmp.eq.s32.totalorder %s27, 3
      %p83 = por %p81, %p82
      %p84 = scmp.ne.s32.totalorder %s73, %s74
      %p85 = scmp.eq.s32.totalorder %s27, 0
      %p86 = por %p84, %p85
      %p87 = scmp.ne.s32.totalorder %s73, %s74
      %p88 = scmp.eq.s32.totalorder %s28, 3
      %p89 = por %p87, %p88
      %p91 = scmp.ne.s32.totalorder %s74, %s90
      %p92 = scmp.eq.s32.totalorder %s28, 0
      %p93 = por %p91, %p92
      %s94 = ssub.s32 %s29, %s41
      %s95 = ssub.s32 %s30, %s37
      %s96 = sor.u32 %s94, %s95
      %p97 = scmp.eq.s32.totalorder %s96, 0
      %s99 = sadd.s32 %s98, 1
      %s100 = scalar_select %p97, %s98, %s99
      %p103 = pneg %p97
      %p104 = scmp.eq.s32.totalorder %s22, 3
      %p105 = por %p103, %p104
      %p106 = scmp.ne.s32.totalorder %s98, %s101
      %p107 = scmp.eq.s32.totalorder %s22, 0
      %p108 = por %p106, %p107
      %p109 = scmp.ne.s32.totalorder %s98, %s101
      %p110 = scmp.eq.s32.totalorder %s27, 3
      %p111 = por %p109, %p110
      %p112 = scmp.ne.s32.totalorder %s101, %s102
      %p113 = scmp.eq.s32.totalorder %s27, 0
      %p114 = por %p112, %p113
      %p115 = scmp.ne.s32.totalorder %s101, %s102
      %p116 = scmp.eq.s32.totalorder %s28, 3
      %p117 = por %p115, %p116
      %p119 = scmp.ne.s32.totalorder %s102, %s118
      %p120 = scmp.eq.s32.totalorder %s28, 0
      %p121 = por %p119, %p120
      %s123 = sadd.s32 %s122, 1
      %p126 = scmp.eq.s32.totalorder %s22, 3
      %p127 = scmp.ne.s32.totalorder %s122, %s124
      %p128 = scmp.eq.s32.totalorder %s22, 0
      %p129 = por %p127, %p128
      %p130 = scmp.ne.s32.totalorder %s122, %s124
      %p131 = scmp.eq.s32.totalorder %s27, 3
      %p132 = por %p130, %p131
      %p133 = scmp.ne.s32.totalorder %s124, %s125
      %p134 = scmp.eq.s32.totalorder %s27, 0
      %p135 = por %p133, %p134
      %p136 = scmp.ne.s32.totalorder %s124, %s125
      %p137 = scmp.eq.s32.totalorder %s28, 3
      %p138 = por %p136, %p137
      %p140 = scmp.ne.s32.totalorder %s125, %s139
      %p141 = scmp.eq.s32.totalorder %s28, 0
      %p142 = por %p140, %p141
      %s144 = sadd.s32 %s143, 1
      %p147 = scmp.eq.s32.totalorder %s22, 3
      %p148 = scmp.ne.s32.totalorder %s143, %s145
      %p149 = scmp.eq.s32.totalorder %s22, 0
      %p150 = por %p148, %p149
      %p151 = scmp.ne.s32.totalorder %s143, %s145
      %p152 = scmp.eq.s32.totalorder %s27, 3
      %p153 = por %p151, %p152
      %p154 = scmp.ne.s32.totalorder %s145, %s146
      %p155 = scmp.eq.s32.totalorder %s27, 0
      %p156 = por %p154, %p155
      %p157 = scmp.ne.s32.totalorder %s145, %s146
      %p158 = scmp.eq.s32.totalorder %s28, 3
      %p159 = por %p157, %p158
      %p161 = scmp.ne.s32.totalorder %s146, %s160
      %p162 = scmp.eq.s32.totalorder %s28, 0
      %p163 = por %p161, %p162
      %s165 = sadd.s32 %s164, 1
      %p168 = scmp.eq.s32.totalorder %s22, 3
      %p169 = scmp.ne.s32.totalorder %s164, %s166
      %p170 = scmp.eq.s32.totalorder %s22, 0
      %p171 = por %p169, %p170
      %p172 = scmp.ne.s32.totalorder %s164, %s166
      %p173 = scmp.eq.s32.totalorder %s27, 3
      %p174 = por %p172, %p173
      %p175 = scmp.ne.s32.totalorder %s166, %s167
      %p176 = scmp.eq.s32.totalorder %s27, 0
      %p177 = por %p175, %p176
      %p178 = scmp.ne.s32.totalorder %s166, %s167
      %p179 = scmp.eq.s32.totalorder %s28, 3
      %p180 = por %p178, %p179
      %p182 = scmp.ne.s32.totalorder %s167, %s181
      %p183 = scmp.eq.s32.totalorder %s28, 0
      %p184 = por %p182, %p183
      %s185 = ssub.s32 %s29, %s41
      %p186 = scmp.eq.s32.totalorder %s185, 0
      %s188 = sadd.s32 %s187, 1
      %s189 = scalar_select %p186, %s187, %s188
      %p192 = pneg %p186
      %p193 = scmp.eq.s32.totalorder %s22, 3
      %p194 = por %p192, %p193
      %p195 = scmp.ne.s32.totalorder %s187, %s190
      %p196 = scmp.eq.s32.totalorder %s22, 0
      %p197 = por %p195, %p196
      %p198 = scmp.ne.s32.totalorder %s187, %s190
      %p199 = scmp.eq.s32.totalorder %s27, 3
      %p200 = por %p198, %p199
      %p201 = scmp.ne.s32.totalorder %s190, %s191
      %p202 = scmp.eq.s32.totalorder %s27, 0
      %p203 = por %p201, %p202
      %p204 = scmp.ne.s32.totalorder %s190, %s191
      %p205 = scmp.eq.s32.totalorder %s28, 3
      %p206 = por %p204, %p205
      %p208 = scmp.ne.s32.totalorder %s191, %s207
      %p209 = scmp.eq.s32.totalorder %s28, 0
      %p210 = por %p208, %p209
      %p211 = scmp.le.s32.totalorder 1, %s22
      %p212 = scmp.lt.s32.totalorder %s22, 5
      %p213 = pnand %p211, %p212
      %p214 = pneg %p213
      // Predicated region
      $region9: #{tpu_custom_call.1} parent=5 // pred_check
        _
      $region10: #{tpu_custom_call.1} parent=5 // pred_check_branch
        %216 = sbr.rel (%p213) target = $region12
      $region11: #{tpu_custom_call.1} parent=5 // pred_region
        %s217 = ssub.s32 %s22, 1
        // Predicated region
        $region13: #{tpu_custom_call.1} parent=11 // pred_check
          %p218 = pneg %p135
        $region14: #{tpu_custom_call.1} parent=11 // pred_check_branch
          %220 = sbr.rel (%p218) target = $region16
        $region15: #{tpu_custom_call.1} parent=11 // pred_region
          %s222 = ssub.s32 1024, 1024
          %223 = vsyncadd [#allocation13], %s222
          %s224 = sshll.u32 [#allocation12], 4
          %s225 = int_to_ptr.vmem [resolvable:$true] %s224
          %230 = dma.hbm_to_vmem [thread:$0]  %s3, 1024, %s225, [#allocation13], 64, 64, 4
        $region16: #{tpu_custom_call.1} parent=11 // pred_fallthru
          _
        // Predicated region
        $region17: #{tpu_custom_call.1} parent=11 // pred_check
          %p231 = pneg %p156
        $region18: #{tpu_custom_call.1} parent=11 // pred_check_branch
          %233 = sbr.rel (%p231) target = $region20
        $region19: #{tpu_custom_call.1} parent=11 // pred_region
          _
        $region20: #{tpu_custom_call.1} parent=11 // pred_fallthru
          _
        // Predicated region
        $region21: #{tpu_custom_call.1} parent=11 // pred_check
          %p234 = pneg %p177
        $region22: #{tpu_custom_call.1} parent=11 // pred_check_branch
          %236 = sbr.rel (%p234) target = $region24
        $region23: #{tpu_custom_call.1} parent=11 // pred_region
          _
        $region24: #{tpu_custom_call.1} parent=11 // pred_fallthru
          _
      $region12: #{tpu_custom_call.1} parent=5 // pred_fallthru
        _
      %p237 = scmp.lt.s32.totalorder %s22, 4
      // Predicated region
      $region25: #{tpu_custom_call.1} parent=5 // pred_check
        %p238 = pneg %p237
      $region26: #{tpu_custom_call.1} parent=5 // pred_check_branch
        %240 = sbr.rel (%p238) target = $region28
      $region27: #{tpu_custom_call.1} parent=5 // pred_region
        // Predicated region
        $region29: #{tpu_custom_call.1} parent=27 // pred_check
          %p241 = pneg %p54
        $region30: #{tpu_custom_call.1} parent=27 // pred_check_branch
          %243 = sbr.rel (%p241) target = $region32
        $region31: #{tpu_custom_call.1} parent=27 // pred_region
          %s244 = sand.u32 %s44, 1
          %s245 = scalar_lea.sflag [#allocation7], %s244
          %s246 = sand.u32 %s44, 1
          %s247 = smul.addr %s246, 64
          %s248 = scalar_lea.vmem [#allocation6], %s247
          %s249 = smul.u32 16, %s30
          %s251 = ssub.s32 1024, 1024
          %252 = vsyncadd %s245, %s251
          %s253 = smul.addr %s249, 64
          %s254 = scalar_lea.hbm %s0, %s253
          %s255 = sshll.u32 %s248, 4
          %s256 = int_to_ptr.vmem [resolvable:$true] %s255
          %261 = dma.hbm_to_vmem [thread:$0]  %s254, 1024, %s256, %s245, 64, 64, 4
        $region32: #{tpu_custom_call.1} parent=27 // pred_fallthru
          _
        // Predicated region
        $region33: #{tpu_custom_call.1} parent=27 // pred_check
          %p262 = pneg %p80
        $region34: #{tpu_custom_call.1} parent=27 // pred_check_branch
          %264 = sbr.rel (%p262) target = $region36
        $region35: #{tpu_custom_call.1} parent=27 // pred_region
          %s265 = sand.u32 %s22, 1
          %s266 = scalar_lea.sflag [#allocation10], %s265
          %s267 = sand.u32 %s70, 1
          %s268 = smul.addr %s267, 32
          %s269 = scalar_lea.vmem [#allocation9], %s268
          %s270 = smul.u32 8, %s29
          %s272 = ssub.s32 512, 512
          %273 = vsyncadd %s266, %s272
          %s274 = smul.addr %s270, 64
          %s275 = scalar_lea.hbm %s1, %s274
          %s276 = sshll.u32 %s269, 4
          %s277 = int_to_ptr.vmem [resolvable:$true] %s276
          %282 = dma.hbm_to_vmem [thread:$0]  %s275, 512, %s277, %s266, 64, 64, 4
        $region36: #{tpu_custom_call.1} parent=27 // pred_fallthru
          _
        // Predicated region
        $region37: #{tpu_custom_call.1} parent=27 // pred_check
          %p283 = pneg %p108
        $region38: #{tpu_custom_call.1} parent=27 // pred_check_branch
          %285 = sbr.rel (%p283) target = $region40
        $region39: #{tpu_custom_call.1} parent=27 // pred_region
          %s286 = sand.u32 %s22, 1
          %s287 = scalar_lea.sflag [#allocation10], %s286
          %s288 = sand.u32 %s98, 1
          %s289 = smul.addr %s288, 16
          %s290 = scalar_lea.vmem [#allocation11], %s289
          %s291 = smul.u32 2, %s29
          %s293 = ssub.s32 256, 256
          %294 = vsyncadd %s287, %s293
          %s295 = smul.addr %s291, 2
          %s296 = sadd.s32 %s30, %s295
          %s297 = smul.addr %s296, 128
          %s298 = scalar_lea.hbm %s2, %s297
          %s299 = sshll.u32 %s290, 4
          %s300 = int_to_ptr.vmem [resolvable:$true] %s299
          %305 = dma.hbm_to_vmem [thread:$0]  %s298, 256, %s300, %s287, 256, 128, 8
        $region40: #{tpu_custom_call.1} parent=27 // pred_fallthru
          _
      $region28: #{tpu_custom_call.1} parent=5 // pred_fallthru
        _
      %p306 = scmp.le.s32.totalorder 1, %s22
      %p307 = scmp.lt.s32.totalorder %s22, 5
      %p308 = pnand %p306, %p307
      %p309 = pneg %p308
      // Predicated region
      $region41: #{tpu_custom_call.1} parent=5 // pred_check
        _
      $region42: #{tpu_custom_call.1} parent=5 // pred_check_branch
        %311 = sbr.rel (%p308) target = $region44
      $region43: #{tpu_custom_call.1} parent=5 // pred_region
        %s312 = ssub.s32 %s22, 1
        %s313 = sand.u32 %s47, 1
        %s314 = scalar_lea.sflag [#allocation7], %s313
        %s315 = sand.u32 %s47, 1
        %s316 = smul.addr %s315, 64
        %s317 = scalar_lea.vmem [#allocation6], %s316
        // Predicated region
        $region45: #{tpu_custom_call.1} parent=43 // pred_check
          %p318 = pneg %p60
        $region46: #{tpu_custom_call.1} parent=43 // pred_check_branch
          %320 = sbr.rel (%p318) target = $region48
        $region47: #{tpu_custom_call.1} parent=43 // pred_region
          %321 = dma.done %s314, 1024
        $region48: #{tpu_custom_call.1} parent=43 // pred_fallthru
          _
        %s322 = sand.u32 %s27, 1
        %s323 = scalar_lea.sflag [#allocation10], %s322
        %s324 = sand.u32 %s73, 1
        %s325 = smul.addr %s324, 32
        %s326 = scalar_lea.vmem [#allocation9], %s325
        // Predicated region
        $region49: #{tpu_custom_call.1} parent=43 // pred_check
          %p327 = pneg %p86
        $region50: #{tpu_custom_call.1} parent=43 // pred_check_branch
          %329 = sbr.rel (%p327) target = $region52
        $region51: #{tpu_custom_call.1} parent=43 // pred_region
          %330 = dma.done %s323, 512
        $region52: #{tpu_custom_call.1} parent=43 // pred_fallthru
          _
        %s331 = sand.u32 %s27, 1
        %s332 = scalar_lea.sflag [#allocation10], %s331
        %s333 = sand.u32 %s101, 1
        %s334 = smul.addr %s333, 16
        %s335 = scalar_lea.vmem [#allocation11], %s334
        // Predicated region
        $region53: #{tpu_custom_call.1} parent=43 // pred_check
          %p336 = pneg %p114
        $region54: #{tpu_custom_call.1} parent=43 // pred_check_branch
          %338 = sbr.rel (%p336) target = $region56
        $region55: #{tpu_custom_call.1} parent=43 // pred_region
          %339 = dma.done %s332, 256
        $region56: #{tpu_custom_call.1} parent=43 // pred_fallthru
          _
        // Predicated region
        $region57: #{tpu_custom_call.1} parent=43 // pred_check
          %p340 = pneg %p135
        $region58: #{tpu_custom_call.1} parent=43 // pred_check_branch
          %342 = sbr.rel (%p340) target = $region60
        $region59: #{tpu_custom_call.1} parent=43 // pred_region
          %343 = dma.done [#allocation13], 1024
        $region60: #{tpu_custom_call.1} parent=43 // pred_fallthru
          _
        %s344 = sand.u32 %s47, 1
        %s345 = scalar_lea.sflag [#allocation7], %s344
        %s346 = sand.u32 %s47, 1
        %s347 = smul.addr %s346, 64
        %s348 = scalar_lea.vmem [#allocation6], %s347
        %p349 = pneg %p60
        %p350 = pneg %p57
        %s351 = sand.u32 %s27, 1
        %s352 = scalar_lea.sflag [#allocation10], %s351
        %s353 = sand.u32 %s73, 1
        %s354 = smul.addr %s353, 32
        %s355 = scalar_lea.vmem [#allocation9], %s354
        %p356 = pneg %p86
        %p357 = pneg %p83
        %s358 = sand.u32 %s27, 1
        %s359 = scalar_lea.sflag [#allocation10], %s358
        %s360 = sand.u32 %s101, 1
        %s361 = smul.addr %s360, 16
        %s362 = scalar_lea.vmem [#allocation11], %s361
        %p363 = pneg %p114
        %p364 = pneg %p111
        %p365 = pneg %p135
        %p366 = pneg %p132
        %p367 = pneg %p156
        %p368 = pneg %p153
        %p369 = pneg %p177
        %p370 = pneg %p174
        %p371 = pneg %p203
        %p372 = pneg %p200
        %s373 = sand.u32 %s190, 1
        %s374 = scalar_lea.sflag [#allocation8], %s373
        %s375 = sand.u32 %s190, 1
        %s376 = smul.addr %s375, 32
        %s377 = scalar_lea.vmem [#allocation14], %s376
        %s378 = smul.u32 16, %s32
        %s379 = smul.u32 8, %s31
        %s380 = smul.u32 2, %s31
        %s381 = smul.u32 8, %s31
        %p383 = scmp.eq.s32.totalorder %s32, 0
        // Predicated region
        $region61: #{tpu_custom_call.1} parent=43 // pred_check
          %p384 = pneg %p383
        $region62: #{tpu_custom_call.1} parent=43 // pred_check_branch
          %386 = sbr.rel (%p384) target = $region64
        $region63: #{tpu_custom_call.1} parent=43 // pred_region
          %v387 = vld [vmem:[%s326] sm:$0xf]
          %v388 = vld [vmem:[%s326 + $0x4] sm:$0xf]
          %v389 = vld [vmem:[%s326 + $0x8] sm:$0xf]
          %v390 = vld [vmem:[%s326 + $0xc] sm:$0xf]
          %v391 = vld [vmem:[%s326 + $0x10] sm:$0xf]
          %v392 = vld [vmem:[%s326 + $0x14] sm:$0xf]
          %v393 = vld [vmem:[%s326 + $0x18] sm:$0xf]
          %v394 = vld [vmem:[%s326 + $0x1c] sm:$0xf]
          %v395 = vld [vmem:[#allocation12] sm:$0xf]
          %v396 = vld [vmem:[#allocation12 + $0x4] sm:$0xf]
          %v397 = vld [vmem:[#allocation12 + $0x8] sm:$0xf]
          %v398 = vld [vmem:[#allocation12 + $0xc] sm:$0xf]
          %v399 = vld [vmem:[#allocation12 + $0x10] sm:$0xf]
          %v400 = vld [vmem:[#allocation12 + $0x14] sm:$0xf]
          %v401 = vld [vmem:[#allocation12 + $0x18] sm:$0xf]
          %v402 = vld [vmem:[#allocation12 + $0x1c] sm:$0xf]
          %v403 = vld [vmem:[#allocation12 + $0x20] sm:$0xf]
          %v404 = vld [vmem:[#allocation12 + $0x24] sm:$0xf]
          %v405 = vld [vmem:[#allocation12 + $0x28] sm:$0xf]
          %v406 = vld [vmem:[#allocation12 + $0x2c] sm:$0xf]
          %v407 = vld [vmem:[#allocation12 + $0x30] sm:$0xf]
          %v408 = vld [vmem:[#allocation12 + $0x34] sm:$0xf]
          %v409 = vld [vmem:[#allocation12 + $0x38] sm:$0xf]
          %v410 = vld [vmem:[#allocation12 + $0x3c] sm:$0xf]
          %v419 = vunpack.c.l.b16 %v387
          %v420 = vunpack.c.l.b16 %v388
          %v421 = vunpack.c.l.b16 %v389
          %v422 = vunpack.c.l.b16 %v390
          %v423 = vunpack.c.l.b16 %v391
          %v424 = vunpack.c.l.b16 %v392
          %v425 = vunpack.c.l.b16 %v393
          %v426 = vunpack.c.l.b16 %v394
          %v427 = vpack.c.b16 %v420, %v419
          %v428 = vpack.c.b16 %v422, %v421
          %v429 = vpack.c.b16 %v424, %v423
          %v430 = vpack.c.b16 %v426, %v425
          %v451 = vunpack.c.l.b16 %v395
          %v452 = vunpack.c.l.b16 %v396
          %v453 = vunpack.c.l.b16 %v397
          %v454 = vunpack.c.l.b16 %v398
          %v455 = vunpack.c.l.b16 %v399
          %v456 = vunpack.c.l.b16 %v400
          %v457 = vunpack.c.l.b16 %v401
          %v458 = vunpack.c.l.b16 %v402
          %v459 = vunpack.c.l.b16 %v403
          %v460 = vunpack.c.l.b16 %v404
          %v461 = vunpack.c.l.b16 %v405
          %v462 = vunpack.c.l.b16 %v406
          %v463 = vunpack.c.l.b16 %v407
          %v464 = vunpack.c.l.b16 %v408
          %v465 = vunpack.c.l.b16 %v409
          %v466 = vunpack.c.l.b16 %v410
          %v467 = vpack.c.b16 %v452, %v451
          %v468 = vpack.c.b16 %v454, %v453
          %v469 = vpack.c.b16 %v456, %v455
          %v470 = vpack.c.b16 %v458, %v457
          %v471 = vpack.c.b16 %v460, %v459
          %v472 = vpack.c.b16 %v462, %v461
          %v473 = vpack.c.b16 %v464, %v463
          %v474 = vpack.c.b16 %v466, %v465
          %483 = vmatprep.subr.bf16.mxu0 0
          %484 = vmatpush1.bf16.msra.mxu0 %v467
          %485 = vmatprep.subr.bf16.mxu0 0
          %486 = vmatpush1.bf16.msra.mxu0 %v468
          %487 = vmatprep.subr.bf16.mxu0 0
          %488 = vmatpush1.bf16.msra.mxu0 %v469
          %489 = vmatprep.subr.bf16.mxu0 0
          %490 = vmatpush1.bf16.msra.mxu0 %v470
          %491 = vmatprep.subr.bf16.mxu0 0
          %492 = vmatpush1.bf16.msra.mxu0 %v471
          %493 = vmatprep.subr.bf16.mxu0 0
          %494 = vmatpush1.bf16.msra.mxu0 %v472
          %495 = vmatprep.subr.bf16.mxu0 0
          %496 = vmatpush1.bf16.msra.mxu0 %v473
          %497 = vmatprep.subr.bf16.mxu0 0
          %498 = vmatpush1.bf16.msra.mxu0 %v474
          %499 = vmatprep.subr.bf16.mxu0 0
          %500 = vmatpush1.bf16.msra.mxu0 0
          %501 = vmatprep.subr.bf16.mxu0 0
          %502 = vmatpush1.bf16.msra.mxu0 0
          %503 = vmatprep.subr.bf16.mxu0 0
          %504 = vmatpush1.bf16.msra.mxu0 0
          %505 = vmatprep.subr.bf16.mxu0 0
          %506 = vmatpush1.bf16.msra.mxu0 0
          %507 = vmatprep.subr.bf16.mxu0 0
          %508 = vmatpush1.bf16.msra.mxu0 0
          %509 = vmatprep.subr.bf16.mxu0 0
          %510 = vmatpush1.bf16.msra.mxu0 0
          %511 = vmatprep.subr.bf16.mxu0 0
          %512 = vmatpush1.bf16.msra.mxu0 0
          %513 = vmatprep.subr.bf16.mxu0 0
          %514 = vmatpush1.bf16.msra.mxu0 0
          %515 = vmatprep.mubr.bf16.mxu0 0
          %516 = vmatmul.mubr.bf16.gmra.mrb[0].mxu0 %v427
          %v517 = vpop.f32.mrb[0].mxu0
          %v518 = vadd.f32 0.0, %v517
          %v519 = vpop.f32.mrb[0].mxu0
          %v520 = vpop.f32.mrb[0].mxu0
          %v521 = vadd.f32 0.0, %v520
          %v522 = vpop.f32.mrb[0].mxu0
          %523 = vmatprep.mubr.bf16.mxu0 0
          %524 = vmatmul.mubr.bf16.gmra.mrb[0].mxu0 %v428
          %v525 = vpop.f32.mrb[0].mxu0
          %v526 = vadd.f32 0.0, %v525
          %v527 = vpop.f32.mrb[0].mxu0
          %v528 = vpop.f32.mrb[0].mxu0
          %v529 = vadd.f32 0.0, %v528
          %v530 = vpop.f32.mrb[0].mxu0
          %531 = vmatprep.mubr.bf16.mxu0 0
          %532 = vmatmul.mubr.bf16.gmra.mrb[0].mxu0 %v429
          %v533 = vpop.f32.mrb[0].mxu0
          %v534 = vadd.f32 0.0, %v533
          %v535 = vpop.f32.mrb[0].mxu0
          %v536 = vpop.f32.mrb[0].mxu0
          %v537 = vadd.f32 0.0, %v536
          %v538 = vpop.f32.mrb[0].mxu0
          %539 = vmatprep.mubr.bf16.mxu0 0
          %540 = vmatmul.mubr.bf16.gmra.mrb[0].mxu0 %v430
          %v541 = vpop.f32.mrb[0].mxu0
          %v542 = vadd.f32 0.0, %v541
          %v543 = vpop.f32.mrb[0].mxu0
          %v544 = vpop.f32.mrb[0].mxu0
          %v545 = vadd.f32 0.0, %v544
          %v546 = vpop.f32.mrb[0].mxu0
          %547 = vdwg.mxu0
          %548 = vst [vmem:[#allocation2] sm:$0xff] %v518
          %549 = vst [vmem:[#allocation2 + $0x8] sm:$0xff] %v521
          %550 = vst [vmem:[#allocation2 + $0x10] sm:$0xff] %v526
          %551 = vst [vmem:[#allocation2 + $0x18] sm:$0xff] %v529
          %552 = vst [vmem:[#allocation2 + $0x20] sm:$0xff] %v534
          %553 = vst [vmem:[#allocation2 + $0x28] sm:$0xff] %v537
          %554 = vst [vmem:[#allocation2 + $0x30] sm:$0xff] %v542
          %555 = vst [vmem:[#allocation2 + $0x38] sm:$0xff] %v545
          %vm556 = vcmask 7168
          %557 = vst.msk [vmem:[#allocation3] sm:$0xff] %vm556, -1e+30
          %558 = vst.msk [vmem:[#allocation3 + $0x8] sm:$0xff] %vm556, -1e+30
          %559 = vst.msk [vmem:[#allocation3 + $0x10] sm:$0xff] %vm556, -1e+30
          %560 = vst.msk [vmem:[#allocation3 + $0x18] sm:$0xff] %vm556, -1e+30
          %561 = vst.msk [vmem:[#allocation3 + $0x20] sm:$0xff] %vm556, -1e+30
          %562 = vst.msk [vmem:[#allocation3 + $0x28] sm:$0xff] %vm556, -1e+30
          %563 = vst.msk [vmem:[#allocation3 + $0x30] sm:$0xff] %vm556, -1e+30
          %564 = vst.msk [vmem:[#allocation3 + $0x38] sm:$0xff] %vm556, -1e+30
          %565 = vst.msk [vmem:[#allocation3 + $0x40] sm:$0xff] %vm556, -1e+30
          %566 = vst.msk [vmem:[#allocation3 + $0x48] sm:$0xff] %vm556, -1e+30
          %567 = vst.msk [vmem:[#allocation3 + $0x50] sm:$0xff] %vm556, -1e+30
          %568 = vst.msk [vmem:[#allocation3 + $0x58] sm:$0xff] %vm556, -1e+30
          %569 = vst.msk [vmem:[#allocation3 + $0x60] sm:$0xff] %vm556, -1e+30
          %570 = vst.msk [vmem:[#allocation3 + $0x68] sm:$0xff] %vm556, -1e+30
          %571 = vst.msk [vmem:[#allocation3 + $0x70] sm:$0xff] %vm556, -1e+30
          %572 = vst.msk [vmem:[#allocation3 + $0x78] sm:$0xff] %vm556, -1e+30
          %573 = vst.msk [vmem:[#allocation4] sm:$0xff] %vm556, 0.0
          %574 = vst.msk [vmem:[#allocation4 + $0x8] sm:$0xff] %vm556, 0.0
          %575 = vst.msk [vmem:[#allocation4 + $0x10] sm:$0xff] %vm556, 0.0
          %576 = vst.msk [vmem:[#allocation4 + $0x18] sm:$0xff] %vm556, 0.0
          %577 = vst.msk [vmem:[#allocation4 + $0x20] sm:$0xff] %vm556, 0.0
          %578 = vst.msk [vmem:[#allocation4 + $0x28] sm:$0xff] %vm556, 0.0
          %579 = vst.msk [vmem:[#allocation4 + $0x30] sm:$0xff] %vm556, 0.0
          %580 = vst.msk [vmem:[#allocation4 + $0x38] sm:$0xff] %vm556, 0.0
          %581 = vst.msk [vmem:[#allocation4 + $0x40] sm:$0xff] %vm556, 0.0
          %582 = vst.msk [vmem:[#allocation4 + $0x48] sm:$0xff] %vm556, 0.0
          %583 = vst.msk [vmem:[#allocation4 + $0x50] sm:$0xff] %vm556, 0.0
          %584 = vst.msk [vmem:[#allocation4 + $0x58] sm:$0xff] %vm556, 0.0
          %585 = vst.msk [vmem:[#allocation4 + $0x60] sm:$0xff] %vm556, 0.0
          %586 = vst.msk [vmem:[#allocation4 + $0x68] sm:$0xff] %vm556, 0.0
          %587 = vst.msk [vmem:[#allocation4 + $0x70] sm:$0xff] %vm556, 0.0
          %588 = vst.msk [vmem:[#allocation4 + $0x78] sm:$0xff] %vm556, 0.0
          %vm589 = vcmask 130048
          %590 = vst.msk [vmem:[#allocation5] sm:$0xff] %vm589, 0.0
          %591 = vst.msk [vmem:[#allocation5 + $0x8] sm:$0xff] %vm589, 0.0
          %592 = vst.msk [vmem:[#allocation5 + $0x10] sm:$0xff] %vm589, 0.0
          %593 = vst.msk [vmem:[#allocation5 + $0x18] sm:$0xff] %vm589, 0.0
          %594 = vst.msk [vmem:[#allocation5 + $0x20] sm:$0xff] %vm589, 0.0
          %595 = vst.msk [vmem:[#allocation5 + $0x28] sm:$0xff] %vm589, 0.0
          %596 = vst.msk [vmem:[#allocation5 + $0x30] sm:$0xff] %vm589, 0.0
          %597 = vst.msk [vmem:[#allocation5 + $0x38] sm:$0xff] %vm589, 0.0
          %598 = vst.msk [vmem:[#allocation5 + $0x40] sm:$0xff] %vm589, 0.0
          %599 = vst.msk [vmem:[#allocation5 + $0x48] sm:$0xff] %vm589, 0.0
          %600 = vst.msk [vmem:[#allocation5 + $0x50] sm:$0xff] %vm589, 0.0
          %601 = vst.msk [vmem:[#allocation5 + $0x58] sm:$0xff] %vm589, 0.0
          %602 = vst.msk [vmem:[#allocation5 + $0x60] sm:$0xff] %vm589, 0.0
          %603 = vst.msk [vmem:[#allocation5 + $0x68] sm:$0xff] %vm589, 0.0
          %604 = vst.msk [vmem:[#allocation5 + $0x70] sm:$0xff] %vm589, 0.0
          %605 = vst.msk [vmem:[#allocation5 + $0x78] sm:$0xff] %vm589, 0.0
        $region64: #{tpu_custom_call.1} parent=43 // pred_fallthru
          _
        %v606 = vld [vmem:[%s317] sm:$0xf]
        %v607 = vld [vmem:[%s317 + $0x4] sm:$0xf]
        %v608 = vld [vmem:[%s317 + $0x8] sm:$0xf]
        %v609 = vld [vmem:[%s317 + $0xc] sm:$0xf]
        %v610 = vld [vmem:[%s317 + $0x10] sm:$0xf]
        %v611 = vld [vmem:[%s317 + $0x14] sm:$0xf]
        %v612 = vld [vmem:[%s317 + $0x18] sm:$0xf]
        %v613 = vld [vmem:[%s317 + $0x1c] sm:$0xf]
        %v614 = vld [vmem:[%s317 + $0x20] sm:$0xf]
        %v615 = vld [vmem:[%s317 + $0x24] sm:$0xf]
        %v616 = vld [vmem:[%s317 + $0x28] sm:$0xf]
        %v617 = vld [vmem:[%s317 + $0x2c] sm:$0xf]
        %v618 = vld [vmem:[%s317 + $0x30] sm:$0xf]
        %v619 = vld [vmem:[%s317 + $0x34] sm:$0xf]
        %v620 = vld [vmem:[%s317 + $0x38] sm:$0xf]
        %v621 = vld [vmem:[%s317 + $0x3c] sm:$0xf]
        %v622 = vld [vmem:[#allocation12] sm:$0xf]
        %v623 = vld [vmem:[#allocation12 + $0x4] sm:$0xf]
        %v624 = vld [vmem:[#allocation12 + $0x8] sm:$0xf]
        %v625 = vld [vmem:[#allocation12 + $0xc] sm:$0xf]
        %v626 = vld [vmem:[#allocation12 + $0x10] sm:$0xf]
        %v627 = vld [vmem:[#allocation12 + $0x14] sm:$0xf]
        %v628 = vld [vmem:[#allocation12 + $0x18] sm:$0xf]
        %v629 = vld [vmem:[#allocation12 + $0x1c] sm:$0xf]
        %v630 = vld [vmem:[#allocation12 + $0x20] sm:$0xf]
        %v631 = vld [vmem:[#allocation12 + $0x24] sm:$0xf]
        %v632 = vld [vmem:[#allocation12 + $0x28] sm:$0xf]
        %v633 = vld [vmem:[#allocation12 + $0x2c] sm:$0xf]
        %v634 = vld [vmem:[#allocation12 + $0x30] sm:$0xf]
        %v635 = vld [vmem:[#allocation12 + $0x34] sm:$0xf]
        %v636 = vld [vmem:[#allocation12 + $0x38] sm:$0xf]
        %v637 = vld [vmem:[#allocation12 + $0x3c] sm:$0xf]
        %v654 = vunpack.c.l.b16 %v606
        %v655 = vunpack.c.l.b16 %v607
        %v656 = vunpack.c.l.b16 %v608
        %v657 = vunpack.c.l.b16 %v609
        %v658 = vunpack.c.l.b16 %v610
        %v659 = vunpack.c.l.b16 %v611
        %v660 = vunpack.c.l.b16 %v612
        %v661 = vunpack.c.l.b16 %v613
        %v662 = vunpack.c.l.b16 %v614
        %v663 = vunpack.c.l.b16 %v615
        %v664 = vunpack.c.l.b16 %v616
        %v665 = vunpack.c.l.b16 %v617
        %v666 = vunpack.c.l.b16 %v618
        %v667 = vunpack.c.l.b16 %v619
        %v668 = vunpack.c.l.b16 %v620
        %v669 = vunpack.c.l.b16 %v621
        %v670 = vpack.c.b16 %v655, %v654
        %v671 = vpack.c.b16 %v657, %v656
        %v672 = vpack.c.b16 %v659, %v658
        %v673 = vpack.c.b16 %v661, %v660
        %v674 = vpack.c.b16 %v663, %v662
        %v675 = vpack.c.b16 %v665, %v664
        %v676 = vpack.c.b16 %v667, %v666
        %v677 = vpack.c.b16 %v669, %v668
        %v702 = vunpack.c.l.b16 %v622
        %v703 = vunpack.c.l.b16 %v623
        %v704 = vunpack.c.l.b16 %v624
        %v705 = vunpack.c.l.b16 %v625
        %v706 = vunpack.c.l.b16 %v626
        %v707 = vunpack.c.l.b16 %v627
        %v708 = vunpack.c.l.b16 %v628
        %v709 = vunpack.c.l.b16 %v629
        %v710 = vunpack.c.l.b16 %v630
        %v711 = vunpack.c.l.b16 %v631
        %v712 = vunpack.c.l.b16 %v632
        %v713 = vunpack.c.l.b16 %v633
        %v714 = vunpack.c.l.b16 %v634
        %v715 = vunpack.c.l.b16 %v635
        %v716 = vunpack.c.l.b16 %v636
        %v717 = vunpack.c.l.b16 %v637
        %v718 = vpack.c.b16 %v703, %v702
        %v719 = vpack.c.b16 %v705, %v704
        %v720 = vpack.c.b16 %v707, %v706
        %v721 = vpack.c.b16 %v709, %v708
        %v722 = vpack.c.b16 %v711, %v710
        %v723 = vpack.c.b16 %v713, %v712
        %v724 = vpack.c.b16 %v715, %v714
        %v725 = vpack.c.b16 %v717, %v716
        %734 = vmatprep.subr.bf16.mxu0 0
        %735 = vmatpush1.bf16.msra.mxu0 %v718
        %736 = vmatprep.subr.bf16.mxu0 0
        %737 = vmatpush1.bf16.msra.mxu0 %v719
        %738 = vmatprep.subr.bf16.mxu0 0
        %739 = vmatpush1.bf16.msra.mxu0 %v720
        %740 = vmatprep.subr.bf16.mxu0 0
        %741 = vmatpush1.bf16.msra.mxu0 %v721
        %742 = vmatprep.subr.bf16.mxu0 0
        %743 = vmatpush1.bf16.msra.mxu0 %v722
        %744 = vmatprep.subr.bf16.mxu0 0
        %745 = vmatpush1.bf16.msra.mxu0 %v723
        %746 = vmatprep.subr.bf16.mxu0 0
        %747 = vmatpush1.bf16.msra.mxu0 %v724
        %748 = vmatprep.subr.bf16.mxu0 0
        %749 = vmatpush1.bf16.msra.mxu0 %v725
        %750 = vmatprep.subr.bf16.mxu0 0
        %751 = vmatpush1.bf16.msra.mxu0 0
        %752 = vmatprep.subr.bf16.mxu0 0
        %753 = vmatpush1.bf16.msra.mxu0 0
        %754 = vmatprep.subr.bf16.mxu0 0
        %755 = vmatpush1.bf16.msra.mxu0 0
        %756 = vmatprep.subr.bf16.mxu0 0
        %757 = vmatpush1.bf16.msra.mxu0 0
        %758 = vmatprep.subr.bf16.mxu0 0
        %759 = vmatpush1.bf16.msra.mxu0 0
        %760 = vmatprep.subr.bf16.mxu0 0
        %761 = vmatpush1.bf16.msra.mxu0 0
        %762 = vmatprep.subr.bf16.mxu0 0
        %763 = vmatpush1.bf16.msra.mxu0 0
        %764 = vmatprep.subr.bf16.mxu0 0
        %765 = vmatpush1.bf16.msra.mxu0 0
        %766 = vmatprep.mubr.bf16.mxu0 0
        %767 = vmatmul.mubr.bf16.gmra.mrb[0].mxu0 %v670
        %v768 = vpop.f32.mrb[0].mxu0
        %v769 = vadd.f32 0.0, %v768
        %v770 = vpop.f32.mrb[0].mxu0
        %v771 = vpop.f32.mrb[0].mxu0
        %v772 = vadd.f32 0.0, %v771
        %v773 = vpop.f32.mrb[0].mxu0
        %774 = vmatprep.mubr.bf16.mxu0 0
        %775 = vmatmul.mubr.bf16.gmra.mrb[0].mxu0 %v671
        %v776 = vpop.f32.mrb[0].mxu0
        %v777 = vadd.f32 0.0, %v776
        %v778 = vpop.f32.mrb[0].mxu0
        %v779 = vpop.f32.mrb[0].mxu0
        %v780 = vadd.f32 0.0, %v779
        %v781 = vpop.f32.mrb[0].mxu0
        %782 = vmatprep.mubr.bf16.mxu0 0
        %783 = vmatmul.mubr.bf16.gmra.mrb[0].mxu0 %v672
        %v784 = vpop.f32.mrb[0].mxu0
        %v785 = vadd.f32 0.0, %v784
        %v786 = vpop.f32.mrb[0].mxu0
        %v787 = vpop.f32.mrb[0].mxu0
        %v788 = vadd.f32 0.0, %v787
        %v789 = vpop.f32.mrb[0].mxu0
        %790 = vmatprep.mubr.bf16.mxu0 0
        %791 = vmatmul.mubr.bf16.gmra.mrb[0].mxu0 %v673
        %v792 = vpop.f32.mrb[0].mxu0
        %v793 = vadd.f32 0.0, %v792
        %v794 = vpop.f32.mrb[0].mxu0
        %v795 = vpop.f32.mrb[0].mxu0
        %v796 = vadd.f32 0.0, %v795
        %v797 = vpop.f32.mrb[0].mxu0
        %798 = vmatprep.mubr.bf16.mxu0 0
        %799 = vmatmul.mubr.bf16.gmra.mrb[0].mxu0 %v674
        %v800 = vpop.f32.mrb[0].mxu0
        %v801 = vadd.f32 0.0, %v800
        %v802 = vpop.f32.mrb[0].mxu0
        %v803 = vpop.f32.mrb[0].mxu0
        %v804 = vadd.f32 0.0, %v803
        %v805 = vpop.f32.mrb[0].mxu0
        %806 = vmatprep.mubr.bf16.mxu0 0
        %807 = vmatmul.mubr.bf16.gmra.mrb[0].mxu0 %v675
        %v808 = vpop.f32.mrb[0].mxu0
        %v809 = vadd.f32 0.0, %v808
        %v810 = vpop.f32.mrb[0].mxu0
        %v811 = vpop.f32.mrb[0].mxu0
        %v812 = vadd.f32 0.0, %v811
        %v813 = vpop.f32.mrb[0].mxu0
        %814 = vmatprep.mubr.bf16.mxu0 0
        %815 = vmatmul.mubr.bf16.gmra.mrb[0].mxu0 %v676
        %v816 = vpop.f32.mrb[0].mxu0
        %v817 = vadd.f32 0.0, %v816
        %v818 = vpop.f32.mrb[0].mxu0
        %v819 = vpop.f32.mrb[0].mxu0
        %v820 = vadd.f32 0.0, %v819
        %v821 = vpop.f32.mrb[0].mxu0
        %822 = vmatprep.mubr.bf16.mxu0 0
        %823 = vmatmul.mubr.bf16.gmra.mrb[0].mxu0 %v677
        %v824 = vpop.f32.mrb[0].mxu0
        %v825 = vadd.f32 0.0, %v824
        %v826 = vpop.f32.mrb[0].mxu0
        %v827 = vpop.f32.mrb[0].mxu0
        %v828 = vadd.f32 0.0, %v827
        %v829 = vpop.f32.mrb[0].mxu0
        %830 = vdwg.mxu0
        %v831 = vld [vmem:[%s4] sm:$0xf]
        %832 = vmatprep.subr.bf16.mxu0 0
        %833 = vmatpush1.bf16.xpose.msra.mxu0 %v670
        %834 = vmatprep.subr.bf16.mxu0 0
        %835 = vmatpush1.bf16.xpose.msra.mxu0 %v671
        %836 = vmatprep.subr.bf16.mxu0 0
        %837 = vmatpush1.bf16.xpose.msra.mxu0 %v672
        %838 = vmatprep.subr.bf16.mxu0 0
        %839 = vmatpush1.bf16.xpose.msra.mxu0 %v673
        %840 = vmatprep.subr.bf16.mxu0 0
        %841 = vmatpush1.bf16.xpose.msra.mxu0 %v674
        %842 = vmatprep.subr.bf16.mxu0 0
        %843 = vmatpush1.bf16.xpose.msra.mxu0 %v675
        %844 = vmatprep.subr.bf16.mxu0 0
        %845 = vmatpush1.bf16.xpose.msra.mxu0 %v676
        %846 = vmatprep.subr.bf16.mxu0 0
        %847 = vmatpush1.bf16.xpose.msra.mxu0 %v677
        %848 = vmatprep.subr.bf16.mxu0 0
        %849 = vmatpush1.bf16.xpose.msra.mxu0 0
        %850 = vmatprep.subr.bf16.mxu0 0
        %851 = vmatpush1.bf16.xpose.msra.mxu0 0
        %852 = vmatprep.subr.bf16.mxu0 0
        %853 = vmatpush1.bf16.xpose.msra.mxu0 0
        %854 = vmatprep.subr.bf16.mxu0 0
        %855 = vmatpush1.bf16.xpose.msra.mxu0 0
        %856 = vmatprep.subr.bf16.mxu0 0
        %857 = vmatpush1.bf16.xpose.msra.mxu0 0
        %858 = vmatprep.subr.bf16.mxu0 0
        %859 = vmatpush1.bf16.xpose.msra.mxu0 0
        %860 = vmatprep.subr.bf16.mxu0 0
        %861 = vmatpush1.bf16.xpose.msra.mxu0 0
        %862 = vmatprep.subr.bf16.mxu0 0
        %863 = vmatpush1.bf16.xpose.msra.mxu0 0
        %864 = vmatprep.mubr.bf16.mxu0 0
        %865 = vmatmul.mubr.bf16.gmra.mrb[0].mxu0 %v831
        %v866 = vpop.f32.mrb[0].mxu0
        %v867 = vadd.f32 0.0, %v866
        %v868 = vpop.f32.mrb[0].mxu0
        %v869 = vpop.f32.mrb[0].mxu0
        %v870 = vpop.f32.mrb[0].mxu0
        %871 = vdwg.mxu0
        %v872 = vpack.c.bf16 %v772, %v769
        %v873 = vpack.c.bf16 %v780, %v777
        %v874 = vpack.c.bf16 %v788, %v785
        %v875 = vpack.c.bf16 %v796, %v793
        %v876 = vpack.c.bf16 %v804, %v801
        %v877 = vpack.c.bf16 %v812, %v809
        %v878 = vpack.c.bf16 %v820, %v817
        %v879 = vpack.c.bf16 %v828, %v825
        %v880 = vld [vmem:[%s335] sm:$0xff]
        %v881 = vld [vmem:[%s335 + $0x8] sm:$0xff]
        %v882 = vunpack.c.0.s8 %v880
        %v883 = vunpack.c.1.s8 %v880
        %v884 = vunpack.c.2.s8 %v880
        %v885 = vunpack.c.3.s8 %v880
        %v886 = vunpack.c.0.s8 %v881
        %v887 = vunpack.c.1.s8 %v881
        %v888 = vunpack.c.2.s8 %v881
        %v889 = vunpack.c.3.s8 %v881
        %v890 = vcvt.s32.f32 %v882
        %v891 = vcvt.s32.f32 %v883
        %v892 = vcvt.s32.f32 %v884
        %v893 = vcvt.s32.f32 %v885
        %v894 = vcvt.s32.f32 %v886
        %v895 = vcvt.s32.f32 %v887
        %v896 = vcvt.s32.f32 %v888
        %v897 = vcvt.s32.f32 %v889
        %v898 = vld [vmem:[#allocation2] sm:$0xff]
        %v899 = vld [vmem:[#allocation2 + $0x8] sm:$0xff]
        %v900 = vld [vmem:[#allocation2 + $0x10] sm:$0xff]
        %v901 = vld [vmem:[#allocation2 + $0x18] sm:$0xff]
        %v902 = vld [vmem:[#allocation2 + $0x20] sm:$0xff]
        %v903 = vld [vmem:[#allocation2 + $0x28] sm:$0xff]
        %v904 = vld [vmem:[#allocation2 + $0x30] sm:$0xff]
        %v905 = vld [vmem:[#allocation2 + $0x38] sm:$0xff]
        %907 = vset.pattern.permute.xlu0 32
        %908 = vperm.xlu0 %907, %v898
        %v909 = vpop.permute.xlu0 %908
        %912 = vset.pattern.permute.xlu0 32
        %913 = vperm.xlu0 %912, %v899
        %v914 = vpop.permute.xlu0 %913
        %917 = vset.pattern.permute.xlu0 32
        %918 = vperm.xlu0 %917, %v900
        %v919 = vpop.permute.xlu0 %918
        %922 = vset.pattern.permute.xlu0 32
        %923 = vperm.xlu0 %922, %v901
        %v924 = vpop.permute.xlu0 %923
        %927 = vset.pattern.permute.xlu0 32
        %928 = vperm.xlu0 %927, %v902
        %v929 = vpop.permute.xlu0 %928
        %932 = vset.pattern.permute.xlu0 32
        %933 = vperm.xlu0 %932, %v903
        %v934 = vpop.permute.xlu0 %933
        %937 = vset.pattern.permute.xlu0 32
        %938 = vperm.xlu0 %937, %v904
        %v939 = vpop.permute.xlu0 %938
        %942 = vset.pattern.permute.xlu0 32
        %943 = vperm.xlu0 %942, %v905
        %v944 = vpop.permute.xlu0 %943
        %v946 = vlaneseq
        %v947 = vshrl.u32 %v946, 7
        %v948 = vsub.s32 0, %v947
        %v949 = vrot.slane %v867, %v948
        %v950 = vadd.f32 %v909, %v949
        %v951 = vadd.f32 %v914, %v949
        %v952 = vadd.f32 %v919, %v949
        %v953 = vadd.f32 %v924, %v949
        %v954 = vadd.f32 %v929, %v949
        %v955 = vadd.f32 %v934, %v949
        %v956 = vadd.f32 %v939, %v949
        %v957 = vadd.f32 %v944, %v949
        %vm958 = vcmp.ge.f32.partialorder %v950, 0.0
        %vm959 = vcmp.ge.f32.partialorder %v951, 0.0
        %vm960 = vcmp.ge.f32.partialorder %v952, 0.0
        %vm961 = vcmp.ge.f32.partialorder %v953, 0.0
        %vm962 = vcmp.ge.f32.partialorder %v954, 0.0
        %vm963 = vcmp.ge.f32.partialorder %v955, 0.0
        %vm964 = vcmp.ge.f32.partialorder %v956, 0.0
        %vm965 = vcmp.ge.f32.partialorder %v957, 0.0
        %v966 = vmul.f32 %v950, 0.2
        %v967 = vmul.f32 %v951, 0.2
        %v968 = vmul.f32 %v952, 0.2
        %v969 = vmul.f32 %v953, 0.2
        %v970 = vmul.f32 %v954, 0.2
        %v971 = vmul.f32 %v955, 0.2
        %v972 = vmul.f32 %v956, 0.2
        %v973 = vmul.f32 %v957, 0.2
        %v974 = vsel %vm958, %v950, %v966
        %v975 = vsel %vm959, %v951, %v967
        %v976 = vsel %vm960, %v952, %v968
        %v977 = vsel %vm961, %v953, %v969
        %v978 = vsel %vm962, %v954, %v970
        %v979 = vsel %vm963, %v955, %v971
        %v980 = vsel %vm964, %v956, %v972
        %v981 = vsel %vm965, %v957, %v973
        %vm982 = vcmp.gt.f32.partialorder %v890, 0.0
        %vm983 = vcmp.gt.f32.partialorder %v891, 0.0
        %vm984 = vcmp.gt.f32.partialorder %v892, 0.0
        %vm985 = vcmp.gt.f32.partialorder %v893, 0.0
        %vm986 = vcmp.gt.f32.partialorder %v894, 0.0
        %vm987 = vcmp.gt.f32.partialorder %v895, 0.0
        %vm988 = vcmp.gt.f32.partialorder %v896, 0.0
        %vm989 = vcmp.gt.f32.partialorder %v897, 0.0
        %v990 = vsel %vm982, %v974, -1e+30
        %v991 = vsel %vm983, %v975, -1e+30
        %v992 = vsel %vm984, %v976, -1e+30
        %v993 = vsel %vm985, %v977, -1e+30
        %v994 = vsel %vm986, %v978, -1e+30
        %v995 = vsel %vm987, %v979, -1e+30
        %v996 = vsel %vm988, %v980, -1e+30
        %v997 = vsel %vm989, %v981, -1e+30
        %v998 = vld [vmem:[#allocation3] sm:$0xff]
        %v999 = vld [vmem:[#allocation3 + $0x8] sm:$0xff]
        %v1000 = vld [vmem:[#allocation3 + $0x10] sm:$0xff]
        %v1001 = vld [vmem:[#allocation3 + $0x18] sm:$0xff]
        %v1002 = vld [vmem:[#allocation3 + $0x20] sm:$0xff]
        %v1003 = vld [vmem:[#allocation3 + $0x28] sm:$0xff]
        %v1004 = vld [vmem:[#allocation3 + $0x30] sm:$0xff]
        %v1005 = vld [vmem:[#allocation3 + $0x38] sm:$0xff]
        %1006 = vmax.xlane.f32.xlu0 %v990
        %v1007 = vpop.xlane.xlu0 %1006
        %1008 = vmax.xlane.f32.xlu0 %v991
        %v1009 = vpop.xlane.xlu0 %1008
        %1010 = vmax.xlane.f32.xlu0 %v992
        %v1011 = vpop.xlane.xlu0 %1010
        %1012 = vmax.xlane.f32.xlu0 %v993
        %v1013 = vpop.xlane.xlu0 %1012
        %1014 = vmax.xlane.f32.xlu0 %v994
        %v1015 = vpop.xlane.xlu0 %1014
        %1016 = vmax.xlane.f32.xlu0 %v995
        %v1017 = vpop.xlane.xlu0 %1016
        %1018 = vmax.xlane.f32.xlu0 %v996
        %v1019 = vpop.xlane.xlu0 %1018
        %1020 = vmax.xlane.f32.xlu0 %v997
        %v1021 = vpop.xlane.xlu0 %1020
        %v1022 = vmax.f32 %v998, %v1007
        %v1023 = vmax.f32 %v999, %v1009
        %v1024 = vmax.f32 %v1000, %v1011
        %v1025 = vmax.f32 %v1001, %v1013
        %v1026 = vmax.f32 %v1002, %v1015
        %v1027 = vmax.f32 %v1003, %v1017
        %v1028 = vmax.f32 %v1004, %v1019
        %v1029 = vmax.f32 %v1005, %v1021
        %v1030 = vsub.f32 %v998, %v1022
        %v1031 = vsub.f32 %v999, %v1023
        %v1032 = vsub.f32 %v1000, %v1024
        %v1033 = vsub.f32 %v1001, %v1025
        %v1034 = vsub.f32 %v1002, %v1026
        %v1035 = vsub.f32 %v1003, %v1027
        %v1036 = vsub.f32 %v1004, %v1028
        %v1037 = vsub.f32 %v1005, %v1029
        %v1038 = vmul.f32 %v1030, 1.442695
        %v1039 = vpow.pop %v1038
        %v1040 = vmul.f32 %v1031, 1.442695
        %v1041 = vpow.pop %v1040
        %v1042 = vmul.f32 %v1032, 1.442695
        %v1043 = vpow.pop %v1042
        %v1044 = vmul.f32 %v1033, 1.442695
        %v1045 = vpow.pop %v1044
        %v1046 = vmul.f32 %v1034, 1.442695
        %v1047 = vpow.pop %v1046
        %v1048 = vmul.f32 %v1035, 1.442695
        %v1049 = vpow.pop %v1048
        %v1050 = vmul.f32 %v1036, 1.442695
        %v1051 = vpow.pop %v1050
        %v1052 = vmul.f32 %v1037, 1.442695
        %v1053 = vpow.pop %v1052
        %1055 = vset.pattern.permute.xlu0 0
        %1056 = vperm.xlu0 %1055, %v1022
        %v1057 = vpop.permute.xlu0 %1056
        %1060 = vset.pattern.permute.xlu0 0
        %1061 = vperm.xlu0 %1060, %v1023
        %v1062 = vpop.permute.xlu0 %1061
        %1065 = vset.pattern.permute.xlu0 0
        %1066 = vperm.xlu0 %1065, %v1024
        %v1067 = vpop.permute.xlu0 %1066
        %1070 = vset.pattern.permute.xlu0 0
        %1071 = vperm.xlu0 %1070, %v1025
        %v1072 = vpop.permute.xlu0 %1071
        %1075 = vset.pattern.permute.xlu0 0
        %1076 = vperm.xlu0 %1075, %v1026
        %v1077 = vpop.permute.xlu0 %1076
        %1080 = vset.pattern.permute.xlu0 0
        %1081 = vperm.xlu0 %1080, %v1027
        %v1082 = vpop.permute.xlu0 %1081
        %1085 = vset.pattern.permute.xlu0 0
        %1086 = vperm.xlu0 %1085, %v1028
        %v1087 = vpop.permute.xlu0 %1086
        %1090 = vset.pattern.permute.xlu0 0
        %1091 = vperm.xlu0 %1090, %v1029
        %v1092 = vpop.permute.xlu0 %1091
        %v1094 = vsub.f32 %v990, %v1057
        %v1095 = vsub.f32 %v991, %v1062
        %v1096 = vsub.f32 %v992, %v1067
        %v1097 = vsub.f32 %v993, %v1072
        %v1098 = vsub.f32 %v994, %v1077
        %v1099 = vsub.f32 %v995, %v1082
        %v1100 = vsub.f32 %v996, %v1087
        %v1101 = vsub.f32 %v997, %v1092
        %v1102 = vmul.f32 %v1094, 1.442695
        %v1103 = vpow.pop %v1102
        %v1104 = vmul.f32 %v1095, 1.442695
        %v1105 = vpow.pop %v1104
        %v1106 = vmul.f32 %v1096, 1.442695
        %v1107 = vpow.pop %v1106
        %v1108 = vmul.f32 %v1097, 1.442695
        %v1109 = vpow.pop %v1108
        %v1110 = vmul.f32 %v1098, 1.442695
        %v1111 = vpow.pop %v1110
        %v1112 = vmul.f32 %v1099, 1.442695
        %v1113 = vpow.pop %v1112
        %v1114 = vmul.f32 %v1100, 1.442695
        %v1115 = vpow.pop %v1114
        %v1116 = vmul.f32 %v1101, 1.442695
        %v1117 = vpow.pop %v1116
        %v1118 = vmul.f32 %v1103, %v890
        %v1119 = vmul.f32 %v1105, %v891
        %v1120 = vmul.f32 %v1107, %v892
        %v1121 = vmul.f32 %v1109, %v893
        %v1122 = vmul.f32 %v1111, %v894
        %v1123 = vmul.f32 %v1113, %v895
        %v1124 = vmul.f32 %v1115, %v896
        %v1125 = vmul.f32 %v1117, %v897
        %v1126 = vld [vmem:[#allocation4] sm:$0xff]
        %v1127 = vld [vmem:[#allocation4 + $0x8] sm:$0xff]
        %v1128 = vld [vmem:[#allocation4 + $0x10] sm:$0xff]
        %v1129 = vld [vmem:[#allocation4 + $0x18] sm:$0xff]
        %v1130 = vld [vmem:[#allocation4 + $0x20] sm:$0xff]
        %v1131 = vld [vmem:[#allocation4 + $0x28] sm:$0xff]
        %v1132 = vld [vmem:[#allocation4 + $0x30] sm:$0xff]
        %v1133 = vld [vmem:[#allocation4 + $0x38] sm:$0xff]
        %v1134 = vmul.f32 %v1039, %v1126
        %v1135 = vmul.f32 %v1041, %v1127
        %v1136 = vmul.f32 %v1043, %v1128
        %v1137 = vmul.f32 %v1045, %v1129
        %v1138 = vmul.f32 %v1047, %v1130
        %v1139 = vmul.f32 %v1049, %v1131
        %v1140 = vmul.f32 %v1051, %v1132
        %v1141 = vmul.f32 %v1053, %v1133
        %1142 = vadd.xlane.f32.xlu0 %v1118
        %v1143 = vpop.xlane.xlu0 %1142
        %1144 = vadd.xlane.f32.xlu0 %v1119
        %v1145 = vpop.xlane.xlu0 %1144
        %1146 = vadd.xlane.f32.xlu0 %v1120
        %v1147 = vpop.xlane.xlu0 %1146
        %1148 = vadd.xlane.f32.xlu0 %v1121
        %v1149 = vpop.xlane.xlu0 %1148
        %1150 = vadd.xlane.f32.xlu0 %v1122
        %v1151 = vpop.xlane.xlu0 %1150
        %1152 = vadd.xlane.f32.xlu0 %v1123
        %v1153 = vpop.xlane.xlu0 %1152
        %1154 = vadd.xlane.f32.xlu0 %v1124
        %v1155 = vpop.xlane.xlu0 %1154
        %1156 = vadd.xlane.f32.xlu0 %v1125
        %v1157 = vpop.xlane.xlu0 %1156
        %v1158 = vadd.f32 %v1134, %v1143
        %v1159 = vadd.f32 %v1135, %v1145
        %v1160 = vadd.f32 %v1136, %v1147
        %v1161 = vadd.f32 %v1137, %v1149
        %v1162 = vadd.f32 %v1138, %v1151
        %v1163 = vadd.f32 %v1139, %v1153
        %v1164 = vadd.f32 %v1140, %v1155
        %v1165 = vadd.f32 %v1141, %v1157
        %vm1166 = vcmask 7168
        %1167 = vst.msk [vmem:[#allocation4] sm:$0xff] %vm1166, %v1158
        %1168 = vst.msk [vmem:[#allocation4 + $0x8] sm:$0xff] %vm1166, %v1159
        %1169 = vst.msk [vmem:[#allocation4 + $0x10] sm:$0xff] %vm1166, %v1160
        %1170 = vst.msk [vmem:[#allocation4 + $0x18] sm:$0xff] %vm1166, %v1161
        %1171 = vst.msk [vmem:[#allocation4 + $0x20] sm:$0xff] %vm1166, %v1162
        %1172 = vst.msk [vmem:[#allocation4 + $0x28] sm:$0xff] %vm1166, %v1163
        %1173 = vst.msk [vmem:[#allocation4 + $0x30] sm:$0xff] %vm1166, %v1164
        %1174 = vst.msk [vmem:[#allocation4 + $0x38] sm:$0xff] %vm1166, %v1165
        %v1175 = vld [vmem:[#allocation5] sm:$0xff]
        %v1176 = vld [vmem:[#allocation5 + $0x8] sm:$0xff]
        %v1177 = vld [vmem:[#allocation5 + $0x10] sm:$0xff]
        %v1178 = vld [vmem:[#allocation5 + $0x18] sm:$0xff]
        %v1179 = vld [vmem:[#allocation5 + $0x20] sm:$0xff]
        %v1180 = vld [vmem:[#allocation5 + $0x28] sm:$0xff]
        %v1181 = vld [vmem:[#allocation5 + $0x30] sm:$0xff]
        %v1182 = vld [vmem:[#allocation5 + $0x38] sm:$0xff]
        %1184 = vset.pattern.permute.xlu0 0
        %1185 = vperm.xlu0 %1184, %v1039
        %v1186 = vpop.permute.xlu0 %1185
        %1189 = vset.pattern.permute.xlu0 0
        %1190 = vperm.xlu0 %1189, %v1041
        %v1191 = vpop.permute.xlu0 %1190
        %1194 = vset.pattern.permute.xlu0 0
        %1195 = vperm.xlu0 %1194, %v1043
        %v1196 = vpop.permute.xlu0 %1195
        %1199 = vset.pattern.permute.xlu0 0
        %1200 = vperm.xlu0 %1199, %v1045
        %v1201 = vpop.permute.xlu0 %1200
        %1204 = vset.pattern.permute.xlu0 0
        %1205 = vperm.xlu0 %1204, %v1047
        %v1206 = vpop.permute.xlu0 %1205
        %1209 = vset.pattern.permute.xlu0 0
        %1210 = vperm.xlu0 %1209, %v1049
        %v1211 = vpop.permute.xlu0 %1210
        %1214 = vset.pattern.permute.xlu0 0
        %1215 = vperm.xlu0 %1214, %v1051
        %v1216 = vpop.permute.xlu0 %1215
        %1219 = vset.pattern.permute.xlu0 0
        %1220 = vperm.xlu0 %1219, %v1053
        %v1221 = vpop.permute.xlu0 %1220
        %v1223 = vmul.f32 %v1186, %v1175
        %v1224 = vmul.f32 %v1191, %v1176
        %v1225 = vmul.f32 %v1196, %v1177
        %v1226 = vmul.f32 %v1201, %v1178
        %v1227 = vmul.f32 %v1206, %v1179
        %v1228 = vmul.f32 %v1211, %v1180
        %v1229 = vmul.f32 %v1216, %v1181
        %v1230 = vmul.f32 %v1221, %v1182
        %v1231 = vpack.c.bf16 %v1119, %v1118
        %v1232 = vpack.c.bf16 %v1121, %v1120
        %v1233 = vpack.c.bf16 %v1123, %v1122
        %v1234 = vpack.c.bf16 %v1125, %v1124
        %1235 = vmatprep.subr.bf16.mxu0 0
        %1236 = vmatpush1.bf16.msra.mxu0 %v872
        %1237 = vmatprep.subr.bf16.mxu0 0
        %1238 = vmatpush1.bf16.msra.mxu0 %v873
        %1239 = vmatprep.subr.bf16.mxu0 0
        %1240 = vmatpush1.bf16.msra.mxu0 %v874
        %1241 = vmatprep.subr.bf16.mxu0 0
        %1242 = vmatpush1.bf16.msra.mxu0 %v875
        %1243 = vmatprep.subr.bf16.mxu0 0
        %1244 = vmatpush1.bf16.msra.mxu0 %v876
        %1245 = vmatprep.subr.bf16.mxu0 0
        %1246 = vmatpush1.bf16.msra.mxu0 %v877
        %1247 = vmatprep.subr.bf16.mxu0 0
        %1248 = vmatpush1.bf16.msra.mxu0 %v878
        %1249 = vmatprep.subr.bf16.mxu0 0
        %1250 = vmatpush1.bf16.msra.mxu0 %v879
        %1251 = vmatprep.subr.bf16.mxu0 0
        %1252 = vmatpush1.bf16.msra.mxu0 0
        %1253 = vmatprep.subr.bf16.mxu0 0
        %1254 = vmatpush1.bf16.msra.mxu0 0
        %1255 = vmatprep.subr.bf16.mxu0 0
        %1256 = vmatpush1.bf16.msra.mxu0 0
        %1257 = vmatprep.subr.bf16.mxu0 0
        %1258 = vmatpush1.bf16.msra.mxu0 0
        %1259 = vmatprep.subr.bf16.mxu0 0
        %1260 = vmatpush1.bf16.msra.mxu0 0
        %1261 = vmatprep.subr.bf16.mxu0 0
        %1262 = vmatpush1.bf16.msra.mxu0 0
        %1263 = vmatprep.subr.bf16.mxu0 0
        %1264 = vmatpush1.bf16.msra.mxu0 0
        %1265 = vmatprep.subr.bf16.mxu0 0
        %1266 = vmatpush1.bf16.msra.mxu0 0
        %1267 = vmatprep.mubr.bf16.mxu0 0
        %1268 = vmatmul.mubr.bf16.gmra.mrb[0].mxu0 %v1231
        %v1269 = vpop.f32.mrb[0].mxu0
        %v1270 = vadd.f32 0.0, %v1269
        %v1271 = vpop.f32.mrb[0].mxu0
        %v1272 = vpop.f32.mrb[0].mxu0
        %v1273 = vadd.f32 0.0, %v1272
        %v1274 = vpop.f32.mrb[0].mxu0
        %1275 = vmatprep.mubr.bf16.mxu0 0
        %1276 = vmatmul.mubr.bf16.gmra.mrb[0].mxu0 %v1232
        %v1277 = vpop.f32.mrb[0].mxu0
        %v1278 = vadd.f32 0.0, %v1277
        %v1279 = vpop.f32.mrb[0].mxu0
        %v1280 = vpop.f32.mrb[0].mxu0
        %v1281 = vadd.f32 0.0, %v1280
        %v1282 = vpop.f32.mrb[0].mxu0
        %1283 = vmatprep.mubr.bf16.mxu0 0
        %1284 = vmatmul.mubr.bf16.gmra.mrb[0].mxu0 %v1233
        %v1285 = vpop.f32.mrb[0].mxu0
        %v1286 = vadd.f32 0.0, %v1285
        %v1287 = vpop.f32.mrb[0].mxu0
        %v1288 = vpop.f32.mrb[0].mxu0
        %v1289 = vadd.f32 0.0, %v1288
        %v1290 = vpop.f32.mrb[0].mxu0
        %1291 = vmatprep.mubr.bf16.mxu0 0
        %1292 = vmatmul.mubr.bf16.gmra.mrb[0].mxu0 %v1234
        %v1293 = vpop.f32.mrb[0].mxu0
        %v1294 = vadd.f32 0.0, %v1293
        %v1295 = vpop.f32.mrb[0].mxu0
        %v1296 = vpop.f32.mrb[0].mxu0
        %v1297 = vadd.f32 0.0, %v1296
        %v1298 = vpop.f32.mrb[0].mxu0
        %1299 = vdwg.mxu0
        %v1300 = vadd.f32 %v1223, %v1270
        %v1301 = vadd.f32 %v1224, %v1273
        %v1302 = vadd.f32 %v1225, %v1278
        %v1303 = vadd.f32 %v1226, %v1281
        %v1304 = vadd.f32 %v1227, %v1286
        %v1305 = vadd.f32 %v1228, %v1289
        %v1306 = vadd.f32 %v1229, %v1294
        %v1307 = vadd.f32 %v1230, %v1297
        %vm1308 = vcmask 130048
        %1309 = vst.msk [vmem:[#allocation5] sm:$0xff] %vm1308, %v1300
        %1310 = vst.msk [vmem:[#allocation5 + $0x8] sm:$0xff] %vm1308, %v1301
        %1311 = vst.msk [vmem:[#allocation5 + $0x10] sm:$0xff] %vm1308, %v1302
        %1312 = vst.msk [vmem:[#allocation5 + $0x18] sm:$0xff] %vm1308, %v1303
        %1313 = vst.msk [vmem:[#allocation5 + $0x20] sm:$0xff] %vm1308, %v1304
        %1314 = vst.msk [vmem:[#allocation5 + $0x28] sm:$0xff] %vm1308, %v1305
        %1315 = vst.msk [vmem:[#allocation5 + $0x30] sm:$0xff] %vm1308, %v1306
        %1316 = vst.msk [vmem:[#allocation5 + $0x38] sm:$0xff] %vm1308, %v1307
        %1317 = vst.msk [vmem:[#allocation3] sm:$0xff] %vm1166, %v1022
        %1318 = vst.msk [vmem:[#allocation3 + $0x8] sm:$0xff] %vm1166, %v1023
        %1319 = vst.msk [vmem:[#allocation3 + $0x10] sm:$0xff] %vm1166, %v1024
        %1320 = vst.msk [vmem:[#allocation3 + $0x18] sm:$0xff] %vm1166, %v1025
        %1321 = vst.msk [vmem:[#allocation3 + $0x20] sm:$0xff] %vm1166, %v1026
        %1322 = vst.msk [vmem:[#allocation3 + $0x28] sm:$0xff] %vm1166, %v1027
        %1323 = vst.msk [vmem:[#allocation3 + $0x30] sm:$0xff] %vm1166, %v1028
        %1324 = vst.msk [vmem:[#allocation3 + $0x38] sm:$0xff] %vm1166, %v1029
        %v1325 = vld [vmem:[#allocation2] sm:$0xff]
        %v1326 = vld [vmem:[#allocation2 + $0x8] sm:$0xff]
        %v1327 = vld [vmem:[#allocation2 + $0x10] sm:$0xff]
        %v1328 = vld [vmem:[#allocation2 + $0x18] sm:$0xff]
        %v1329 = vld [vmem:[#allocation2 + $0x20] sm:$0xff]
        %v1330 = vld [vmem:[#allocation2 + $0x28] sm:$0xff]
        %v1331 = vld [vmem:[#allocation2 + $0x30] sm:$0xff]
        %v1332 = vld [vmem:[#allocation2 + $0x38] sm:$0xff]
        %1334 = vset.pattern.permute.xlu0 33
        %1335 = vperm.xlu0 %1334, %v1325
        %v1336 = vpop.permute.xlu0 %1335
        %1339 = vset.pattern.permute.xlu0 33
        %1340 = vperm.xlu0 %1339, %v1326
        %v1341 = vpop.permute.xlu0 %1340
        %1344 = vset.pattern.permute.xlu0 33
        %1345 = vperm.xlu0 %1344, %v1327
        %v1346 = vpop.permute.xlu0 %1345
        %1349 = vset.pattern.permute.xlu0 33
        %1350 = vperm.xlu0 %1349, %v1328
        %v1351 = vpop.permute.xlu0 %1350
        %1354 = vset.pattern.permute.xlu0 33
        %1355 = vperm.xlu0 %1354, %v1329
        %v1356 = vpop.permute.xlu0 %1355
        %1359 = vset.pattern.permute.xlu0 33
        %1360 = vperm.xlu0 %1359, %v1330
        %v1361 = vpop.permute.xlu0 %1360
        %1364 = vset.pattern.permute.xlu0 33
        %1365 = vperm.xlu0 %1364, %v1331
        %v1366 = vpop.permute.xlu0 %1365
        %1369 = vset.pattern.permute.xlu0 33
        %1370 = vperm.xlu0 %1369, %v1332
        %v1371 = vpop.permute.xlu0 %1370
        %v1373 = vlaneseq
        %v1374 = vshrl.u32 %v1373, 7
        %v1375 = vsub.s32 1, %v1374
        %v1376 = vrot.slane %v867, %v1375
        %v1377 = vadd.f32 %v1336, %v1376
        %v1378 = vadd.f32 %v1341, %v1376
        %v1379 = vadd.f32 %v1346, %v1376
        %v1380 = vadd.f32 %v1351, %v1376
        %v1381 = vadd.f32 %v1356, %v1376
        %v1382 = vadd.f32 %v1361, %v1376
        %v1383 = vadd.f32 %v1366, %v1376
        %v1384 = vadd.f32 %v1371, %v1376
        %vm1385 = vcmp.ge.f32.partialorder %v1377, 0.0
        %vm1386 = vcmp.ge.f32.partialorder %v1378, 0.0
        %vm1387 = vcmp.ge.f32.partialorder %v1379, 0.0
        %vm1388 = vcmp.ge.f32.partialorder %v1380, 0.0
        %vm1389 = vcmp.ge.f32.partialorder %v1381, 0.0
        %vm1390 = vcmp.ge.f32.partialorder %v1382, 0.0
        %vm1391 = vcmp.ge.f32.partialorder %v1383, 0.0
        %vm1392 = vcmp.ge.f32.partialorder %v1384, 0.0
        %v1393 = vmul.f32 %v1377, 0.2
        %v1394 = vmul.f32 %v1378, 0.2
        %v1395 = vmul.f32 %v1379, 0.2
        %v1396 = vmul.f32 %v1380, 0.2
        %v1397 = vmul.f32 %v1381, 0.2
        %v1398 = vmul.f32 %v1382, 0.2
        %v1399 = vmul.f32 %v1383, 0.2
        %v1400 = vmul.f32 %v1384, 0.2
        %v1401 = vsel %vm1385, %v1377, %v1393
        %v1402 = vsel %vm1386, %v1378, %v1394
        %v1403 = vsel %vm1387, %v1379, %v1395
        %v1404 = vsel %vm1388, %v1380, %v1396
        %v1405 = vsel %vm1389, %v1381, %v1397
        %v1406 = vsel %vm1390, %v1382, %v1398
        %v1407 = vsel %vm1391, %v1383, %v1399
        %v1408 = vsel %vm1392, %v1384, %v1400
        %v1409 = vsel %vm982, %v1401, -1e+30
        %v1410 = vsel %vm983, %v1402, -1e+30
        %v1411 = vsel %vm984, %v1403, -1e+30
        %v1412 = vsel %vm985, %v1404, -1e+30
        %v1413 = vsel %vm986, %v1405, -1e+30
        %v1414 = vsel %vm987, %v1406, -1e+30
        %v1415 = vsel %vm988, %v1407, -1e+30
        %v1416 = vsel %vm989, %v1408, -1e+30
        %s1417 = scalar_lea.vmem [#allocation3], 64
        %v1418 = vld [vmem:[%s1417] sm:$0xff]
        %v1419 = vld [vmem:[%s1417 + $0x8] sm:$0xff]
        %v1420 = vld [vmem:[%s1417 + $0x10] sm:$0xff]
        %v1421 = vld [vmem:[%s1417 + $0x18] sm:$0xff]
        %v1422 = vld [vmem:[%s1417 + $0x20] sm:$0xff]
        %v1423 = vld [vmem:[%s1417 + $0x28] sm:$0xff]
        %v1424 = vld [vmem:[%s1417 + $0x30] sm:$0xff]
        %v1425 = vld [vmem:[%s1417 + $0x38] sm:$0xff]
        %1426 = vmax.xlane.f32.xlu0 %v1409
        %v1427 = vpop.xlane.xlu0 %1426
        %1428 = vmax.xlane.f32.xlu0 %v1410
        %v1429 = vpop.xlane.xlu0 %1428
        %1430 = vmax.xlane.f32.xlu0 %v1411
        %v1431 = vpop.xlane.xlu0 %1430
        %1432 = vmax.xlane.f32.xlu0 %v1412
        %v1433 = vpop.xlane.xlu0 %1432
        %1434 = vmax.xlane.f32.xlu0 %v1413
        %v1435 = vpop.xlane.xlu0 %1434
        %1436 = vmax.xlane.f32.xlu0 %v1414
        %v1437 = vpop.xlane.xlu0 %1436
        %1438 = vmax.xlane.f32.xlu0 %v1415
        %v1439 = vpop.xlane.xlu0 %1438
        %1440 = vmax.xlane.f32.xlu0 %v1416
        %v1441 = vpop.xlane.xlu0 %1440
        %v1442 = vmax.f32 %v1418, %v1427
        %v1443 = vmax.f32 %v1419, %v1429
        %v1444 = vmax.f32 %v1420, %v1431
        %v1445 = vmax.f32 %v1421, %v1433
        %v1446 = vmax.f32 %v1422, %v1435
        %v1447 = vmax.f32 %v1423, %v1437
        %v1448 = vmax.f32 %v1424, %v1439
        %v1449 = vmax.f32 %v1425, %v1441
        %v1450 = vsub.f32 %v1418, %v1442
        %v1451 = vsub.f32 %v1419, %v1443
        %v1452 = vsub.f32 %v1420, %v1444
        %v1453 = vsub.f32 %v1421, %v1445
        %v1454 = vsub.f32 %v1422, %v1446
        %v1455 = vsub.f32 %v1423, %v1447
        %v1456 = vsub.f32 %v1424, %v1448
        %v1457 = vsub.f32 %v1425, %v1449
        %v1458 = vmul.f32 %v1450, 1.442695
        %v1459 = vpow.pop %v1458
        %v1460 = vmul.f32 %v1451, 1.442695
        %v1461 = vpow.pop %v1460
        %v1462 = vmul.f32 %v1452, 1.442695
        %v1463 = vpow.pop %v1462
        %v1464 = vmul.f32 %v1453, 1.442695
        %v1465 = vpow.pop %v1464
        %v1466 = vmul.f32 %v1454, 1.442695
        %v1467 = vpow.pop %v1466
        %v1468 = vmul.f32 %v1455, 1.442695
        %v1469 = vpow.pop %v1468
        %v1470 = vmul.f32 %v1456, 1.442695
        %v1471 = vpow.pop %v1470
        %v1472 = vmul.f32 %v1457, 1.442695
        %v1473 = vpow.pop %v1472
        %1475 = vset.pattern.permute.xlu0 0
        %1476 = vperm.xlu0 %1475, %v1442
        %v1477 = vpop.permute.xlu0 %1476
        %1480 = vset.pattern.permute.xlu0 0
        %1481 = vperm.xlu0 %1480, %v1443
        %v1482 = vpop.permute.xlu0 %1481
        %1485 = vset.pattern.permute.xlu0 0
        %1486 = vperm.xlu0 %1485, %v1444
        %v1487 = vpop.permute.xlu0 %1486
        %1490 = vset.pattern.permute.xlu0 0
        %1491 = vperm.xlu0 %1490, %v1445
        %v1492 = vpop.permute.xlu0 %1491
        %1495 = vset.pattern.permute.xlu0 0
        %1496 = vperm.xlu0 %1495, %v1446
        %v1497 = vpop.permute.xlu0 %1496
        %1500 = vset.pattern.permute.xlu0 0
        %1501 = vperm.xlu0 %1500, %v1447
        %v1502 = vpop.permute.xlu0 %1501
        %1505 = vset.pattern.permute.xlu0 0
        %1506 = vperm.xlu0 %1505, %v1448
        %v1507 = vpop.permute.xlu0 %1506
        %1510 = vset.pattern.permute.xlu0 0
        %1511 = vperm.xlu0 %1510, %v1449
        %v1512 = vpop.permute.xlu0 %1511
        %v1514 = vsub.f32 %v1409, %v1477
        %v1515 = vsub.f32 %v1410, %v1482
        %v1516 = vsub.f32 %v1411, %v1487
        %v1517 = vsub.f32 %v1412, %v1492
        %v1518 = vsub.f32 %v1413, %v1497
        %v1519 = vsub.f32 %v1414, %v1502
        %v1520 = vsub.f32 %v1415, %v1507
        %v1521 = vsub.f32 %v1416, %v1512
        %v1522 = vmul.f32 %v1514, 1.442695
        %v1523 = vpow.pop %v1522
        %v1524 = vmul.f32 %v1515, 1.442695
        %v1525 = vpow.pop %v1524
        %v1526 = vmul.f32 %v1516, 1.442695
        %v1527 = vpow.pop %v1526
        %v1528 = vmul.f32 %v1517, 1.442695
        %v1529 = vpow.pop %v1528
        %v1530 = vmul.f32 %v1518, 1.442695
        %v1531 = vpow.pop %v1530
        %v1532 = vmul.f32 %v1519, 1.442695
        %v1533 = vpow.pop %v1532
        %v1534 = vmul.f32 %v1520, 1.442695
        %v1535 = vpow.pop %v1534
        %v1536 = vmul.f32 %v1521, 1.442695
        %v1537 = vpow.pop %v1536
        %v1538 = vmul.f32 %v1523, %v890
        %v1539 = vmul.f32 %v1525, %v891
        %v1540 = vmul.f32 %v1527, %v892
        %v1541 = vmul.f32 %v1529, %v893
        %v1542 = vmul.f32 %v1531, %v894
        %v1543 = vmul.f32 %v1533, %v895
        %v1544 = vmul.f32 %v1535, %v896
        %v1545 = vmul.f32 %v1537, %v897
        %s1546 = scalar_lea.vmem [#allocation4], 64
        %v1547 = vld [vmem:[%s1546] sm:$0xff]
        %v1548 = vld [vmem:[%s1546 + $0x8] sm:$0xff]
        %v1549 = vld [vmem:[%s1546 + $0x10] sm:$0xff]
        %v1550 = vld [vmem:[%s1546 + $0x18] sm:$0xff]
        %v1551 = vld [vmem:[%s1546 + $0x20] sm:$0xff]
        %v1552 = vld [vmem:[%s1546 + $0x28] sm:$0xff]
        %v1553 = vld [vmem:[%s1546 + $0x30] sm:$0xff]
        %v1554 = vld [vmem:[%s1546 + $0x38] sm:$0xff]
        %v1555 = vmul.f32 %v1459, %v1547
        %v1556 = vmul.f32 %v1461, %v1548
        %v1557 = vmul.f32 %v1463, %v1549
        %v1558 = vmul.f32 %v1465, %v1550
        %v1559 = vmul.f32 %v1467, %v1551
        %v1560 = vmul.f32 %v1469, %v1552
        %v1561 = vmul.f32 %v1471, %v1553
        %v1562 = vmul.f32 %v1473, %v1554
        %1563 = vadd.xlane.f32.xlu0 %v1538
        %v1564 = vpop.xlane.xlu0 %1563
        %1565 = vadd.xlane.f32.xlu0 %v1539
        %v1566 = vpop.xlane.xlu0 %1565
        %1567 = vadd.xlane.f32.xlu0 %v1540
        %v1568 = vpop.xlane.xlu0 %1567
        %1569 = vadd.xlane.f32.xlu0 %v1541
        %v1570 = vpop.xlane.xlu0 %1569
        %1571 = vadd.xlane.f32.xlu0 %v1542
        %v1572 = vpop.xlane.xlu0 %1571
        %1573 = vadd.xlane.f32.xlu0 %v1543
        %v1574 = vpop.xlane.xlu0 %1573
        %1575 = vadd.xlane.f32.xlu0 %v1544
        %v1576 = vpop.xlane.xlu0 %1575
        %1577 = vadd.xlane.f32.xlu0 %v1545
        %v1578 = vpop.xlane.xlu0 %1577
        %v1579 = vadd.f32 %v1555, %v1564
        %v1580 = vadd.f32 %v1556, %v1566
        %v1581 = vadd.f32 %v1557, %v1568
        %v1582 = vadd.f32 %v1558, %v1570
        %v1583 = vadd.f32 %v1559, %v1572
        %v1584 = vadd.f32 %v1560, %v1574
        %v1585 = vadd.f32 %v1561, %v1576
        %v1586 = vadd.f32 %v1562, %v1578
        %1587 = vst.msk [vmem:[%s1546] sm:$0xff] %vm1166, %v1579
        %1588 = vst.msk [vmem:[%s1546 + $0x8] sm:$0xff] %vm1166, %v1580
        %1589 = vst.msk [vmem:[%s1546 + $0x10] sm:$0xff] %vm1166, %v1581
        %1590 = vst.msk [vmem:[%s1546 + $0x18] sm:$0xff] %vm1166, %v1582
        %1591 = vst.msk [vmem:[%s1546 + $0x20] sm:$0xff] %vm1166, %v1583
        %1592 = vst.msk [vmem:[%s1546 + $0x28] sm:$0xff] %vm1166, %v1584
        %1593 = vst.msk [vmem:[%s1546 + $0x30] sm:$0xff] %vm1166, %v1585
        %1594 = vst.msk [vmem:[%s1546 + $0x38] sm:$0xff] %vm1166, %v1586
        %s1595 = scalar_lea.vmem [#allocation5], 64
        %v1596 = vld [vmem:[%s1595] sm:$0xff]
        %v1597 = vld [vmem:[%s1595 + $0x8] sm:$0xff]
        %v1598 = vld [vmem:[%s1595 + $0x10] sm:$0xff]
        %v1599 = vld [vmem:[%s1595 + $0x18] sm:$0xff]
        %v1600 = vld [vmem:[%s1595 + $0x20] sm:$0xff]
        %v1601 = vld [vmem:[%s1595 + $0x28] sm:$0xff]
        %v1602 = vld [vmem:[%s1595 + $0x30] sm:$0xff]
        %v1603 = vld [vmem:[%s1595 + $0x38] sm:$0xff]
        %1605 = vset.pattern.permute.xlu0 0
        %1606 = vperm.xlu0 %1605, %v1459
        %v1607 = vpop.permute.xlu0 %1606
        %1610 = vset.pattern.permute.xlu0 0
        %1611 = vperm.xlu0 %1610, %v1461
        %v1612 = vpop.permute.xlu0 %1611
        %1615 = vset.pattern.permute.xlu0 0
        %1616 = vperm.xlu0 %1615, %v1463
        %v1617 = vpop.permute.xlu0 %1616
        %1620 = vset.pattern.permute.xlu0 0
        %1621 = vperm.xlu0 %1620, %v1465
        %v1622 = vpop.permute.xlu0 %1621
        %1625 = vset.pattern.permute.xlu0 0
        %1626 = vperm.xlu0 %1625, %v1467
        %v1627 = vpop.permute.xlu0 %1626
        %1630 = vset.pattern.permute.xlu0 0
        %1631 = vperm.xlu0 %1630, %v1469
        %v1632 = vpop.permute.xlu0 %1631
        %1635 = vset.pattern.permute.xlu0 0
        %1636 = vperm.xlu0 %1635, %v1471
        %v1637 = vpop.permute.xlu0 %1636
        %1640 = vset.pattern.permute.xlu0 0
        %1641 = vperm.xlu0 %1640, %v1473
        %v1642 = vpop.permute.xlu0 %1641
        %v1644 = vmul.f32 %v1607, %v1596
        %v1645 = vmul.f32 %v1612, %v1597
        %v1646 = vmul.f32 %v1617, %v1598
        %v1647 = vmul.f32 %v1622, %v1599
        %v1648 = vmul.f32 %v1627, %v1600
        %v1649 = vmul.f32 %v1632, %v1601
        %v1650 = vmul.f32 %v1637, %v1602
        %v1651 = vmul.f32 %v1642, %v1603
        %v1652 = vpack.c.bf16 %v1539, %v1538
        %v1653 = vpack.c.bf16 %v1541, %v1540
        %v1654 = vpack.c.bf16 %v1543, %v1542
        %v1655 = vpack.c.bf16 %v1545, %v1544
        %1664 = vrot.lane.b32.xlu0 %v872, 112
        %v1665 = vpop.permute.xlu0 %1664
        %1666 = vrot.lane.b32.xlu0 %v873, 112
        %v1667 = vpop.permute.xlu0 %1666
        %1668 = vrot.lane.b32.xlu0 %v874, 112
        %v1669 = vpop.permute.xlu0 %1668
        %1670 = vrot.lane.b32.xlu0 %v875, 112
        %v1671 = vpop.permute.xlu0 %1670
        %1672 = vrot.lane.b32.xlu0 %v876, 112
        %v1673 = vpop.permute.xlu0 %1672
        %1674 = vrot.lane.b32.xlu0 %v877, 112
        %v1675 = vpop.permute.xlu0 %1674
        %1676 = vrot.lane.b32.xlu0 %v878, 112
        %v1677 = vpop.permute.xlu0 %1676
        %1678 = vrot.lane.b32.xlu0 %v879, 112
        %v1679 = vpop.permute.xlu0 %1678
        %1688 = vmatprep.subr.bf16.mxu0 0
        %1689 = vmatpush1.bf16.msra.mxu0 %v1665
        %1690 = vmatprep.subr.bf16.mxu0 0
        %1691 = vmatpush1.bf16.msra.mxu0 %v1667
        %1692 = vmatprep.subr.bf16.mxu0 0
        %1693 = vmatpush1.bf16.msra.mxu0 %v1669
        %1694 = vmatprep.subr.bf16.mxu0 0
        %1695 = vmatpush1.bf16.msra.mxu0 %v1671
        %1696 = vmatprep.subr.bf16.mxu0 0
        %1697 = vmatpush1.bf16.msra.mxu0 %v1673
        %1698 = vmatprep.subr.bf16.mxu0 0
        %1699 = vmatpush1.bf16.msra.mxu0 %v1675
        %1700 = vmatprep.subr.bf16.mxu0 0
        %1701 = vmatpush1.bf16.msra.mxu0 %v1677
        %1702 = vmatprep.subr.bf16.mxu0 0
        %1703 = vmatpush1.bf16.msra.mxu0 %v1679
        %1704 = vmatprep.subr.bf16.mxu0 0
        %1705 = vmatpush1.bf16.msra.mxu0 0
        %1706 = vmatprep.subr.bf16.mxu0 0
        %1707 = vmatpush1.bf16.msra.mxu0 0
        %1708 = vmatprep.subr.bf16.mxu0 0
        %1709 = vmatpush1.bf16.msra.mxu0 0
        %1710 = vmatprep.subr.bf16.mxu0 0
        %1711 = vmatpush1.bf16.msra.mxu0 0
        %1712 = vmatprep.subr.bf16.mxu0 0
        %1713 = vmatpush1.bf16.msra.mxu0 0
        %1714 = vmatprep.subr.bf16.mxu0 0
        %1715 = vmatpush1.bf16.msra.mxu0 0
        %1716 = vmatprep.subr.bf16.mxu0 0
        %1717 = vmatpush1.bf16.msra.mxu0 0
        %1718 = vmatprep.subr.bf16.mxu0 0
        %1719 = vmatpush1.bf16.msra.mxu0 0
        %1720 = vmatprep.mubr.bf16.mxu0 0
        %1721 = vmatmul.mubr.bf16.gmra.mrb[0].mxu0 %v1652
        %v1722 = vpop.f32.mrb[0].mxu0
        %v1723 = vadd.f32 0.0, %v1722
        %v1724 = vpop.f32.mrb[0].mxu0
        %v1725 = vpop.f32.mrb[0].mxu0
        %v1726 = vadd.f32 0.0, %v1725
        %v1727 = vpop.f32.mrb[0].mxu0
        %1728 = vmatprep.mubr.bf16.mxu0 0
        %1729 = vmatmul.mubr.bf16.gmra.mrb[0].mxu0 %v1653
        %v1730 = vpop.f32.mrb[0].mxu0
        %v1731 = vadd.f32 0.0, %v1730
        %v1732 = vpop.f32.mrb[0].mxu0
        %v1733 = vpop.f32.mrb[0].mxu0
        %v1734 = vadd.f32 0.0, %v1733
        %v1735 = vpop.f32.mrb[0].mxu0
        %1736 = vmatprep.mubr.bf16.mxu0 0
        %1737 = vmatmul.mubr.bf16.gmra.mrb[0].mxu0 %v1654
        %v1738 = vpop.f32.mrb[0].mxu0
        %v1739 = vadd.f32 0.0, %v1738
        %v1740 = vpop.f32.mrb[0].mxu0
        %v1741 = vpop.f32.mrb[0].mxu0
        %v1742 = vadd.f32 0.0, %v1741
        %v1743 = vpop.f32.mrb[0].mxu0
        %1744 = vmatprep.mubr.bf16.mxu0 0
        %1745 = vmatmul.mubr.bf16.gmra.mrb[0].mxu0 %v1655
        %v1746 = vpop.f32.mrb[0].mxu0
        %v1747 = vadd.f32 0.0, %v1746
        %v1748 = vpop.f32.mrb[0].mxu0
        %v1749 = vpop.f32.mrb[0].mxu0
        %v1750 = vadd.f32 0.0, %v1749
        %v1751 = vpop.f32.mrb[0].mxu0
        %1752 = vdwg.mxu0
        %v1753 = vadd.f32 %v1644, %v1723
        %v1754 = vadd.f32 %v1645, %v1726
        %v1755 = vadd.f32 %v1646, %v1731
        %v1756 = vadd.f32 %v1647, %v1734
        %v1757 = vadd.f32 %v1648, %v1739
        %v1758 = vadd.f32 %v1649, %v1742
        %v1759 = vadd.f32 %v1650, %v1747
        %v1760 = vadd.f32 %v1651, %v1750
        %1761 = vst.msk [vmem:[%s1595] sm:$0xff] %vm1308, %v1753
        %1762 = vst.msk [vmem:[%s1595 + $0x8] sm:$0xff] %vm1308, %v1754
        %1763 = vst.msk [vmem:[%s1595 + $0x10] sm:$0xff] %vm1308, %v1755
        %1764 = vst.msk [vmem:[%s1595 + $0x18] sm:$0xff] %vm1308, %v1756
        %1765 = vst.msk [vmem:[%s1595 + $0x20] sm:$0xff] %vm1308, %v1757
        %1766 = vst.msk [vmem:[%s1595 + $0x28] sm:$0xff] %vm1308, %v1758
        %1767 = vst.msk [vmem:[%s1595 + $0x30] sm:$0xff] %vm1308, %v1759
        %1768 = vst.msk [vmem:[%s1595 + $0x38] sm:$0xff] %vm1308, %v1760
        %1769 = vst.msk [vmem:[%s1417] sm:$0xff] %vm1166, %v1442
        %1770 = vst.msk [vmem:[%s1417 + $0x8] sm:$0xff] %vm1166, %v1443
        %1771 = vst.msk [vmem:[%s1417 + $0x10] sm:$0xff] %vm1166, %v1444
        %1772 = vst.msk [vmem:[%s1417 + $0x18] sm:$0xff] %vm1166, %v1445
        %1773 = vst.msk [vmem:[%s1417 + $0x20] sm:$0xff] %vm1166, %v1446
        %1774 = vst.msk [vmem:[%s1417 + $0x28] sm:$0xff] %vm1166, %v1447
        %1775 = vst.msk [vmem:[%s1417 + $0x30] sm:$0xff] %vm1166, %v1448
        %1776 = vst.msk [vmem:[%s1417 + $0x38] sm:$0xff] %vm1166, %v1449
        %p1777 = scmp.eq.s32.totalorder %s32, 1
        // Predicated region
        $region65: #{tpu_custom_call.1} parent=43 // pred_check
          %p1778 = pneg %p1777
        $region66: #{tpu_custom_call.1} parent=43 // pred_check_branch
          %1780 = sbr.rel (%p1778) target = $region68
        $region67: #{tpu_custom_call.1} parent=43 // pred_region
          %v1781 = vld [vmem:[%s5] sm:$0x1]
          %1782 = vst [vmem:[%s377] sm:$0xf] 0
          %1783 = vst [vmem:[%s377 + $0x4] sm:$0xf] 0
          %1784 = vst [vmem:[%s377 + $0x8] sm:$0xf] 0
          %1785 = vst [vmem:[%s377 + $0xc] sm:$0xf] 0
          %1786 = vst [vmem:[%s377 + $0x10] sm:$0xf] 0
          %1787 = vst [vmem:[%s377 + $0x14] sm:$0xf] 0
          %1788 = vst [vmem:[%s377 + $0x18] sm:$0xf] 0
          %1789 = vst [vmem:[%s377 + $0x1c] sm:$0xf] 0
          %v1790 = vld [vmem:[#allocation4] sm:$0xff]
          %v1791 = vld [vmem:[#allocation4 + $0x8] sm:$0xff]
          %v1792 = vld [vmem:[#allocation4 + $0x10] sm:$0xff]
          %v1793 = vld [vmem:[#allocation4 + $0x18] sm:$0xff]
          %v1794 = vld [vmem:[#allocation4 + $0x20] sm:$0xff]
          %v1795 = vld [vmem:[#allocation4 + $0x28] sm:$0xff]
          %v1796 = vld [vmem:[#allocation4 + $0x30] sm:$0xff]
          %v1797 = vld [vmem:[#allocation4 + $0x38] sm:$0xff]
          %vm1798 = vcmp.gt.f32.partialorder %v1790, 0.0
          %vm1799 = vcmp.gt.f32.partialorder %v1791, 0.0
          %vm1800 = vcmp.gt.f32.partialorder %v1792, 0.0
          %vm1801 = vcmp.gt.f32.partialorder %v1793, 0.0
          %vm1802 = vcmp.gt.f32.partialorder %v1794, 0.0
          %vm1803 = vcmp.gt.f32.partialorder %v1795, 0.0
          %vm1804 = vcmp.gt.f32.partialorder %v1796, 0.0
          %vm1805 = vcmp.gt.f32.partialorder %v1797, 0.0
          %v1806 = vsel %vm1798, 1, 0
          %v1807 = vsel %vm1799, 1, 0
          %v1808 = vsel %vm1800, 1, 0
          %v1809 = vsel %vm1801, 1, 0
          %v1810 = vsel %vm1802, 1, 0
          %v1811 = vsel %vm1803, 1, 0
          %v1812 = vsel %vm1804, 1, 0
          %v1813 = vsel %vm1805, 1, 0
          %v1814 = vcvt.s32.f32 %v1806
          %v1815 = vcvt.s32.f32 %v1807
          %v1816 = vcvt.s32.f32 %v1808
          %v1817 = vcvt.s32.f32 %v1809
          %v1818 = vcvt.s32.f32 %v1810
          %v1819 = vcvt.s32.f32 %v1811
          %v1820 = vcvt.s32.f32 %v1812
          %v1821 = vcvt.s32.f32 %v1813
          %v1822 = vsub.f32 1.0, %v1814
          %v1823 = vsub.f32 1.0, %v1815
          %v1824 = vsub.f32 1.0, %v1816
          %v1825 = vsub.f32 1.0, %v1817
          %v1826 = vsub.f32 1.0, %v1818
          %v1827 = vsub.f32 1.0, %v1819
          %v1828 = vsub.f32 1.0, %v1820
          %v1829 = vsub.f32 1.0, %v1821
          %v1830 = vadd.f32 %v1790, %v1822
          %v1831 = vadd.f32 %v1791, %v1823
          %v1832 = vadd.f32 %v1792, %v1824
          %v1833 = vadd.f32 %v1793, %v1825
          %v1834 = vadd.f32 %v1794, %v1826
          %v1835 = vadd.f32 %v1795, %v1827
          %v1836 = vadd.f32 %v1796, %v1828
          %v1837 = vadd.f32 %v1797, %v1829
          %v1838 = vrcp.pop %v1830
          %v1839 = vrcp.pop %v1831
          %v1840 = vrcp.pop %v1832
          %v1841 = vrcp.pop %v1833
          %v1842 = vrcp.pop %v1834
          %v1843 = vrcp.pop %v1835
          %v1844 = vrcp.pop %v1836
          %v1845 = vrcp.pop %v1837
          %v1846 = vld [vmem:[#allocation5] sm:$0xff]
          %v1847 = vld [vmem:[#allocation5 + $0x8] sm:$0xff]
          %v1848 = vld [vmem:[#allocation5 + $0x10] sm:$0xff]
          %v1849 = vld [vmem:[#allocation5 + $0x18] sm:$0xff]
          %v1850 = vld [vmem:[#allocation5 + $0x20] sm:$0xff]
          %v1851 = vld [vmem:[#allocation5 + $0x28] sm:$0xff]
          %v1852 = vld [vmem:[#allocation5 + $0x30] sm:$0xff]
          %v1853 = vld [vmem:[#allocation5 + $0x38] sm:$0xff]
          %1855 = vset.pattern.permute.xlu0 0
          %1856 = vperm.xlu0 %1855, %v1838
          %v1857 = vpop.permute.xlu0 %1856
          %1860 = vset.pattern.permute.xlu0 0
          %1861 = vperm.xlu0 %1860, %v1839
          %v1862 = vpop.permute.xlu0 %1861
          %1865 = vset.pattern.permute.xlu0 0
          %1866 = vperm.xlu0 %1865, %v1840
          %v1867 = vpop.permute.xlu0 %1866
          %1870 = vset.pattern.permute.xlu0 0
          %1871 = vperm.xlu0 %1870, %v1841
          %v1872 = vpop.permute.xlu0 %1871
          %1875 = vset.pattern.permute.xlu0 0
          %1876 = vperm.xlu0 %1875, %v1842
          %v1877 = vpop.permute.xlu0 %1876
          %1880 = vset.pattern.permute.xlu0 0
          %1881 = vperm.xlu0 %1880, %v1843
          %v1882 = vpop.permute.xlu0 %1881
          %1885 = vset.pattern.permute.xlu0 0
          %1886 = vperm.xlu0 %1885, %v1844
          %v1887 = vpop.permute.xlu0 %1886
          %1890 = vset.pattern.permute.xlu0 0
          %1891 = vperm.xlu0 %1890, %v1845
          %v1892 = vpop.permute.xlu0 %1891
          %v1894 = vmul.f32 %v1846, %v1857
          %v1895 = vmul.f32 %v1847, %v1862
          %v1896 = vmul.f32 %v1848, %v1867
          %v1897 = vmul.f32 %v1849, %v1872
          %v1898 = vmul.f32 %v1850, %v1877
          %v1899 = vmul.f32 %v1851, %v1882
          %v1900 = vmul.f32 %v1852, %v1887
          %v1901 = vmul.f32 %v1853, %v1892
          %v1903 = vlaneseq
          %v1904 = vshrl.u32 %v1903, 7
          %v1905 = vsub.s32 0, %v1904
          %v1906 = vrot.slane %v1781, %v1905
          %v1908 = vadd.f32 %v1894, %v1906
          %v1909 = vadd.f32 %v1895, %v1906
          %v1910 = vadd.f32 %v1896, %v1906
          %v1911 = vadd.f32 %v1897, %v1906
          %v1912 = vadd.f32 %v1898, %v1906
          %v1913 = vadd.f32 %v1899, %v1906
          %v1914 = vadd.f32 %v1900, %v1906
          %v1915 = vadd.f32 %v1901, %v1906
          %v1916 = vmax.f32 %v1908, 0.0
          %v1917 = vmax.f32 %v1909, 0.0
          %v1918 = vmax.f32 %v1910, 0.0
          %v1919 = vmax.f32 %v1911, 0.0
          %v1920 = vmax.f32 %v1912, 0.0
          %v1921 = vmax.f32 %v1913, 0.0
          %v1922 = vmax.f32 %v1914, 0.0
          %v1923 = vmax.f32 %v1915, 0.0
          %v1924 = vpack.c.bf16 %v1917, %v1916
          %v1925 = vpack.c.bf16 %v1919, %v1918
          %v1926 = vpack.c.bf16 %v1921, %v1920
          %v1927 = vpack.c.bf16 %v1923, %v1922
          %v1932 = vunpack.c.l.b16 %v1924
          %v1933 = vunpack.c.h.b16 %v1924
          %v1934 = vunpack.c.l.b16 %v1925
          %v1935 = vunpack.c.h.b16 %v1925
          %v1936 = vunpack.c.l.b16 %v1926
          %v1937 = vunpack.c.h.b16 %v1926
          %v1938 = vunpack.c.l.b16 %v1927
          %v1939 = vunpack.c.h.b16 %v1927
          %v1940 = vpack.c.b16 %v1932, %v1932
          %v1941 = vpack.c.b16 %v1933, %v1933
          %v1942 = vpack.c.b16 %v1934, %v1934
          %v1943 = vpack.c.b16 %v1935, %v1935
          %v1944 = vpack.c.b16 %v1936, %v1936
          %v1945 = vpack.c.b16 %v1937, %v1937
          %v1946 = vpack.c.b16 %v1938, %v1938
          %v1947 = vpack.c.b16 %v1939, %v1939
          %vm1956 = vcmask 125952
          %1957 = vst.msk [vmem:[%s377] sm:$0xf] %vm1956, %v1940
          %1958 = vst.msk [vmem:[%s377 + $0x4] sm:$0xf] %vm1956, %v1941
          %1959 = vst.msk [vmem:[%s377 + $0x8] sm:$0xf] %vm1956, %v1942
          %1960 = vst.msk [vmem:[%s377 + $0xc] sm:$0xf] %vm1956, %v1943
          %1961 = vst.msk [vmem:[%s377 + $0x10] sm:$0xf] %vm1956, %v1944
          %1962 = vst.msk [vmem:[%s377 + $0x14] sm:$0xf] %vm1956, %v1945
          %1963 = vst.msk [vmem:[%s377 + $0x18] sm:$0xf] %vm1956, %v1946
          %1964 = vst.msk [vmem:[%s377 + $0x1c] sm:$0xf] %vm1956, %v1947
          %v1965 = vld [vmem:[%s1546] sm:$0xff]
          %v1966 = vld [vmem:[%s1546 + $0x8] sm:$0xff]
          %v1967 = vld [vmem:[%s1546 + $0x10] sm:$0xff]
          %v1968 = vld [vmem:[%s1546 + $0x18] sm:$0xff]
          %v1969 = vld [vmem:[%s1546 + $0x20] sm:$0xff]
          %v1970 = vld [vmem:[%s1546 + $0x28] sm:$0xff]
          %v1971 = vld [vmem:[%s1546 + $0x30] sm:$0xff]
          %v1972 = vld [vmem:[%s1546 + $0x38] sm:$0xff]
          %vm1973 = vcmp.gt.f32.partialorder %v1965, 0.0
          %vm1974 = vcmp.gt.f32.partialorder %v1966, 0.0
          %vm1975 = vcmp.gt.f32.partialorder %v1967, 0.0
          %vm1976 = vcmp.gt.f32.partialorder %v1968, 0.0
          %vm1977 = vcmp.gt.f32.partialorder %v1969, 0.0
          %vm1978 = vcmp.gt.f32.partialorder %v1970, 0.0
          %vm1979 = vcmp.gt.f32.partialorder %v1971, 0.0
          %vm1980 = vcmp.gt.f32.partialorder %v1972, 0.0
          %v1981 = vsel %vm1973, 1, 0
          %v1982 = vsel %vm1974, 1, 0
          %v1983 = vsel %vm1975, 1, 0
          %v1984 = vsel %vm1976, 1, 0
          %v1985 = vsel %vm1977, 1, 0
          %v1986 = vsel %vm1978, 1, 0
          %v1987 = vsel %vm1979, 1, 0
          %v1988 = vsel %vm1980, 1, 0
          %v1989 = vcvt.s32.f32 %v1981
          %v1990 = vcvt.s32.f32 %v1982
          %v1991 = vcvt.s32.f32 %v1983
          %v1992 = vcvt.s32.f32 %v1984
          %v1993 = vcvt.s32.f32 %v1985
          %v1994 = vcvt.s32.f32 %v1986
          %v1995 = vcvt.s32.f32 %v1987
          %v1996 = vcvt.s32.f32 %v1988
          %v1997 = vsub.f32 1.0, %v1989
          %v1998 = vsub.f32 1.0, %v1990
          %v1999 = vsub.f32 1.0, %v1991
          %v2000 = vsub.f32 1.0, %v1992
          %v2001 = vsub.f32 1.0, %v1993
          %v2002 = vsub.f32 1.0, %v1994
          %v2003 = vsub.f32 1.0, %v1995
          %v2004 = vsub.f32 1.0, %v1996
          %v2005 = vadd.f32 %v1965, %v1997
          %v2006 = vadd.f32 %v1966, %v1998
          %v2007 = vadd.f32 %v1967, %v1999
          %v2008 = vadd.f32 %v1968, %v2000
          %v2009 = vadd.f32 %v1969, %v2001
          %v2010 = vadd.f32 %v1970, %v2002
          %v2011 = vadd.f32 %v1971, %v2003
          %v2012 = vadd.f32 %v1972, %v2004
          %v2013 = vrcp.pop %v2005
          %v2014 = vrcp.pop %v2006
          %v2015 = vrcp.pop %v2007
          %v2016 = vrcp.pop %v2008
          %v2017 = vrcp.pop %v2009
          %v2018 = vrcp.pop %v2010
          %v2019 = vrcp.pop %v2011
          %v2020 = vrcp.pop %v2012
          %v2021 = vld [vmem:[%s1595] sm:$0xff]
          %v2022 = vld [vmem:[%s1595 + $0x8] sm:$0xff]
          %v2023 = vld [vmem:[%s1595 + $0x10] sm:$0xff]
          %v2024 = vld [vmem:[%s1595 + $0x18] sm:$0xff]
          %v2025 = vld [vmem:[%s1595 + $0x20] sm:$0xff]
          %v2026 = vld [vmem:[%s1595 + $0x28] sm:$0xff]
          %v2027 = vld [vmem:[%s1595 + $0x30] sm:$0xff]
          %v2028 = vld [vmem:[%s1595 + $0x38] sm:$0xff]
          %2030 = vset.pattern.permute.xlu0 0
          %2031 = vperm.xlu0 %2030, %v2013
          %v2032 = vpop.permute.xlu0 %2031
          %2035 = vset.pattern.permute.xlu0 0
          %2036 = vperm.xlu0 %2035, %v2014
          %v2037 = vpop.permute.xlu0 %2036
          %2040 = vset.pattern.permute.xlu0 0
          %2041 = vperm.xlu0 %2040, %v2015
          %v2042 = vpop.permute.xlu0 %2041
          %2045 = vset.pattern.permute.xlu0 0
          %2046 = vperm.xlu0 %2045, %v2016
          %v2047 = vpop.permute.xlu0 %2046
          %2050 = vset.pattern.permute.xlu0 0
          %2051 = vperm.xlu0 %2050, %v2017
          %v2052 = vpop.permute.xlu0 %2051
          %2055 = vset.pattern.permute.xlu0 0
          %2056 = vperm.xlu0 %2055, %v2018
          %v2057 = vpop.permute.xlu0 %2056
          %2060 = vset.pattern.permute.xlu0 0
          %2061 = vperm.xlu0 %2060, %v2019
          %v2062 = vpop.permute.xlu0 %2061
          %2065 = vset.pattern.permute.xlu0 0
          %2066 = vperm.xlu0 %2065, %v2020
          %v2067 = vpop.permute.xlu0 %2066
          %v2069 = vmul.f32 %v2021, %v2032
          %v2070 = vmul.f32 %v2022, %v2037
          %v2071 = vmul.f32 %v2023, %v2042
          %v2072 = vmul.f32 %v2024, %v2047
          %v2073 = vmul.f32 %v2025, %v2052
          %v2074 = vmul.f32 %v2026, %v2057
          %v2075 = vmul.f32 %v2027, %v2062
          %v2076 = vmul.f32 %v2028, %v2067
          %2077 = vrot.lane.b32.xlu0 %v1906, 112
          %v2078 = vpop.permute.xlu0 %2077
          %v2080 = vadd.f32 %v2069, %v2078
          %v2081 = vadd.f32 %v2070, %v2078
          %v2082 = vadd.f32 %v2071, %v2078
          %v2083 = vadd.f32 %v2072, %v2078
          %v2084 = vadd.f32 %v2073, %v2078
          %v2085 = vadd.f32 %v2074, %v2078
          %v2086 = vadd.f32 %v2075, %v2078
          %v2087 = vadd.f32 %v2076, %v2078
          %v2088 = vmax.f32 %v2080, 0.0
          %v2089 = vmax.f32 %v2081, 0.0
          %v2090 = vmax.f32 %v2082, 0.0
          %v2091 = vmax.f32 %v2083, 0.0
          %v2092 = vmax.f32 %v2084, 0.0
          %v2093 = vmax.f32 %v2085, 0.0
          %v2094 = vmax.f32 %v2086, 0.0
          %v2095 = vmax.f32 %v2087, 0.0
          %v2096 = vpack.c.bf16 %v2089, %v2088
          %v2097 = vpack.c.bf16 %v2091, %v2090
          %v2098 = vpack.c.bf16 %v2093, %v2092
          %v2099 = vpack.c.bf16 %v2095, %v2094
          %v2104 = vunpack.c.l.b16 %v2096
          %v2105 = vunpack.c.h.b16 %v2096
          %v2106 = vunpack.c.l.b16 %v2097
          %v2107 = vunpack.c.h.b16 %v2097
          %v2108 = vunpack.c.l.b16 %v2098
          %v2109 = vunpack.c.h.b16 %v2098
          %v2110 = vunpack.c.l.b16 %v2099
          %v2111 = vunpack.c.h.b16 %v2099
          %v2112 = vpack.c.b16 %v2104, %v2104
          %v2113 = vpack.c.b16 %v2105, %v2105
          %v2114 = vpack.c.b16 %v2106, %v2106
          %v2115 = vpack.c.b16 %v2107, %v2107
          %v2116 = vpack.c.b16 %v2108, %v2108
          %v2117 = vpack.c.b16 %v2109, %v2109
          %v2118 = vpack.c.b16 %v2110, %v2110
          %v2119 = vpack.c.b16 %v2111, %v2111
          %2120 = vrot.lane.b32.xlu0 %v2112, 16
          %v2121 = vpop.permute.xlu0 %2120
          %2122 = vrot.lane.b32.xlu0 %v2113, 16
          %v2123 = vpop.permute.xlu0 %2122
          %2124 = vrot.lane.b32.xlu0 %v2114, 16
          %v2125 = vpop.permute.xlu0 %2124
          %2126 = vrot.lane.b32.xlu0 %v2115, 16
          %v2127 = vpop.permute.xlu0 %2126
          %2128 = vrot.lane.b32.xlu0 %v2116, 16
          %v2129 = vpop.permute.xlu0 %2128
          %2130 = vrot.lane.b32.xlu0 %v2117, 16
          %v2131 = vpop.permute.xlu0 %2130
          %2132 = vrot.lane.b32.xlu0 %v2118, 16
          %v2133 = vpop.permute.xlu0 %2132
          %2134 = vrot.lane.b32.xlu0 %v2119, 16
          %v2135 = vpop.permute.xlu0 %2134
          %vm2144 = vcmask 257152
          %2145 = vst.msk [vmem:[%s377] sm:$0xf] %vm2144, %v2121
          %2146 = vst.msk [vmem:[%s377 + $0x4] sm:$0xf] %vm2144, %v2123
          %2147 = vst.msk [vmem:[%s377 + $0x8] sm:$0xf] %vm2144, %v2125
          %2148 = vst.msk [vmem:[%s377 + $0xc] sm:$0xf] %vm2144, %v2127
          %2149 = vst.msk [vmem:[%s377 + $0x10] sm:$0xf] %vm2144, %v2129
          %2150 = vst.msk [vmem:[%s377 + $0x14] sm:$0xf] %vm2144, %v2131
          %2151 = vst.msk [vmem:[%s377 + $0x18] sm:$0xf] %vm2144, %v2133
          %2152 = vst.msk [vmem:[%s377 + $0x1c] sm:$0xf] %vm2144, %v2135
        $region68: #{tpu_custom_call.1} parent=43 // pred_fallthru
          _
        %s2153 = sand.u32 %s190, 1
        %s2154 = scalar_lea.sflag [#allocation8], %s2153
        %s2155 = sand.u32 %s190, 1
        %s2156 = smul.addr %s2155, 32
        %s2157 = scalar_lea.vmem [#allocation14], %s2156
        // Predicated region
        $region69: #{tpu_custom_call.1} parent=43 // pred_check
          %p2158 = pneg %p200
        $region70: #{tpu_custom_call.1} parent=43 // pred_check_branch
          %2160 = sbr.rel (%p2158) target = $region72
        $region71: #{tpu_custom_call.1} parent=43 // pred_region
          %s2161 = smul.u32 8, %s31
          %s2163 = ssub.s32 512, 512
          %2164 = vsyncadd %s2154, %s2163
          %s2165 = smul.addr %s2161, 64
          %s2166 = scalar_lea.hbm %s6, %s2165
          %s2167 = sshll.u32 %s2157, 4
          %s2168 = int_to_ptr.vmem [resolvable:$true] %s2167
          %2173 = dma.vmem_to_hbm [thread:$0]  %s2168, 512, %s2166, %s2154, 64, 64, 4
        $region72: #{tpu_custom_call.1} parent=43 // pred_fallthru
          _
      $region44: #{tpu_custom_call.1} parent=5 // pred_fallthru
        _
      %p2174 = scmp.le.s32.totalorder 2, %s22
      // Predicated region
      $region73: #{tpu_custom_call.1} parent=5 // pred_check
        %p2175 = pneg %p2174
      $region74: #{tpu_custom_call.1} parent=5 // pred_check_branch
        %2177 = sbr.rel (%p2175) target = $region76
      $region75: #{tpu_custom_call.1} parent=5 // pred_region
        %s2178 = ssub.s32 %s22, 2
        // Predicated region
        $region77: #{tpu_custom_call.1} parent=75 // pred_check
          %p2179 = pneg %p206
        $region78: #{tpu_custom_call.1} parent=75 // pred_check_branch
          %2181 = sbr.rel (%p2179) target = $region80
        $region79: #{tpu_custom_call.1} parent=75 // pred_region
          %s2182 = sand.u32 %s191, 1
          %s2183 = scalar_lea.sflag [#allocation8], %s2182
          %s2184 = sand.u32 %s191, 1
          %s2185 = smul.addr %s2184, 32
          %s2186 = scalar_lea.vmem [#allocation14], %s2185
          %2187 = dma.done %s2183, 512
        $region80: #{tpu_custom_call.1} parent=75 // pred_fallthru
          _
      $region76: #{tpu_custom_call.1} parent=5 // pred_fallthru
        _
    $region6: #{tpu_custom_call.1} parent=1 // loop_footer
      %s26 = sadd.s32 1, %s22
    $region7: #{tpu_custom_call.1} parent=1 // loop_footer_branch
      %21 = sbr.rel target = $region3
    $region8: #{tpu_custom_call.1} parent=1 // loop_exit
      _
    %2188 = vsyncpa [#allocation7], 1
    %s2189 = scalar_lea.sflag [#allocation7], 1
    %2190 = vsyncpa %s2189, 1
    %2191 = vsyncpa [#allocation10], 1
    %s2192 = scalar_lea.sflag [#allocation10], 1
    %2193 = vsyncpa %s2192, 1
    %2194 = vsyncpa [#allocation13], 1
    %2195 = vsyncpa [#allocation8], 1
    %s2196 = scalar_lea.sflag [#allocation8], 1
    %2197 = vsyncpa %s2196, 1

</llo_original>
